<compile_context>
chip_gen: v6e
topology: v6e:2x2x1
jax: 0.10.0
libtpu: 0.0.40
codegen_flags: <defaults>
</compile_context>

<pallas_src>
import functools

import jax
import jax.numpy as jnp
from jax.experimental import pallas as pl
from jax.experimental.pallas import tpu as pltpu

LANE = 128  # TPU lane width: pad small channel / class dims up to this.


def _round_up(x, m):
    return (x + m - 1) // m * m


# ------------------------------- fused kernel -------------------------------

def _fused_conv_pool_fc_kernel(
    x_ref,      # (R, C_in)            flattened image rows (+ zero pad rows), one batch
    mask_ref,   # (2, TM, C_in)        0/1 masks: [0]=left tap valid, [1]=right tap valid
    wt_ref,     # (9, C_in, C_OUT_PAD) conv weights per 3x3 tap (lane-padded)
    cb_ref,     # (1, C_OUT_PAD)       conv bias (lane-padded)
    fw_ref,     # (C_OUT_PAD, NC_PAD)  fc weights (lane-padded)
    fb_ref,     # (1, NC_PAD)          fc bias (lane-padded)
    o_ref,      # (1, NC_PAD)          logits for this batch element
    acc_ref,    # VMEM scratch (1, C_OUT_PAD) f32: running pooled channel sum
    *, W, pad_rows, tile_rows_flat, hw_total, c_out_pad):
    rt = pl.program_id(1)

    @pl.when(rt == 0)
    def _init():
        acc_ref[...] = jnp.zeros_like(acc_ref)

    row0 = rt * tile_rows_flat
    # Pre-broadcast (host-side) wrap-around masks: one multiply per boundary tap,
    # no in-kernel compares / selects / broadcasts.
    mask_l = mask_ref[0]                       # (TM, C_in)
    mask_r = mask_ref[1]                       # (TM, C_in)

    # conv as 9 accumulated (TM, C_in) @ (C_in, C_OUT_PAD) matmuls over shifted
    # contiguous slices of the flattened image (no im2col materialization).
    conv = jnp.zeros((tile_rows_flat, c_out_pad), jnp.float32)
    for t in range(9):
        di, dj = t // 3 - 1, t % 3 - 1
        start = pad_rows + row0 + di * W + dj
        xt = x_ref[pl.ds(start, tile_rows_flat), :]        # (TM, C_in)
        if dj == -1:
            xt = xt * mask_l
        elif dj == 1:
            xt = xt * mask_r
        conv += jnp.dot(xt, wt_ref[t], preferred_element_type=jnp.float32)

    conv = jnp.maximum(conv + cb_ref[...], 0.0)            # bias + ReLU (f32)

    # Partial global-average-pool: channel sums via a ones-vector matmul (MXU,
    # which has plenty of slack here — keeps the VPU/XLU free).
    ones_row = jnp.ones((1, tile_rows_flat), jnp.float32)
    acc_ref[...] += jnp.dot(ones_row, conv, preferred_element_type=jnp.float32)

    @pl.when(rt == pl.num_programs(1) - 1)
    def _finalize():
        pooled = acc_ref[...] * (1.0 / float(hw_total))    # (1, C_OUT_PAD)
        logits = jnp.dot(pooled, fw_ref[...], preferred_element_type=jnp.float32)
        o_ref[...] = (logits + fb_ref[...]).astype(o_ref.dtype)


# ------------------------------- host wrapper --------------------------------

def forward_image_model(data_dict, params, *, tile_rows=None,
                        compute_dtype=jnp.float32):
    """Equivalent of ForwardImageModel.forward: runs the inner CNN on
    data_dict['image'] (NCHW, like PyTorch) with a single fused Pallas kernel.

    compute_dtype=jnp.bfloat16 doubles MXU throughput / halves image DMA bytes
    on v6e/v7x (accumulation stays f32); keep f32 for tight (1e-4) tolerances.
    """
    x_nchw = data_dict["image"]
    B, C_in, H, W = x_nchw.shape
    C_out = params["conv_w"].shape[0]
    num_classes = params["fc_w"].shape[1]

    C_OUT_PAD = _round_up(C_out, LANE)
    NC_PAD = _round_up(num_classes, LANE)

    # ---- row-tile choice (in image rows); TM = tile_rows * W flat rows ------
    if tile_rows is None:
        tile_rows = H
        while tile_rows * W > 1024 and tile_rows % 2 == 0:
            tile_rows //= 2
    assert H % tile_rows == 0, "tile_rows must divide H"
    TM = tile_rows * W
    assert TM % 8 == 0 or TM == H * W
    n_rt = H // tile_rows

    # ---- host-side layout (1x input size; NO 9x im2col blow-up) -------------
    # flatten spatial to rows, zero-pad W+1 rows top/bottom so every tap shift
    # (di*W + dj) is a contiguous in-bounds slice inside the kernel.
    x_flat = jnp.transpose(x_nchw, (0, 2, 3, 1)).reshape(B, H * W, C_in)
    PADR = W + 1
    x_fp = jnp.pad(x_flat, ((0, 0), (PADR, PADR), (0, 0))).astype(compute_dtype)
    R = H * W + 2 * PADR
    # TODO(synk): for very large H*W, stream row-tiles + halo via manual DMA
    # instead of holding the whole padded image per batch element in VMEM.

    # 0/1 wrap-around masks for the dj = -1 / +1 taps, pre-broadcast to C_in so
    # the kernel does a single vmul per boundary tap (no compare/select/bcast).
    col = jnp.arange(H * W, dtype=jnp.int32) % W
    mask_lr = jnp.stack([(col >= 1), (col <= W - 2)], axis=0)        # (2, H*W)
    mask_lr = jnp.broadcast_to(mask_lr[:, :, None], (2, H * W, C_in))
    mask_lr = mask_lr.astype(compute_dtype)

    # conv weights (C_out, C_in, 3, 3) -> (3,3,C_in,C_out) -> (9, C_in, C_out) -> pad
    w_taps = jnp.transpose(params["conv_w"], (2, 3, 1, 0)).reshape(9, C_in, C_out)
    w_taps = jnp.pad(w_taps, ((0, 0), (0, 0), (0, C_OUT_PAD - C_out))).astype(compute_dtype)
    cb = jnp.pad(params["conv_b"].reshape(1, C_out).astype(jnp.float32),
                 ((0, 0), (0, C_OUT_PAD - C_out)))
    fw = jnp.pad(params["fc_w"].astype(jnp.float32),
                 ((0, C_OUT_PAD - C_out), (0, NC_PAD - num_classes)))
    fb = jnp.pad(params["fc_b"].reshape(1, num_classes).astype(jnp.float32),
                 ((0, 0), (0, NC_PAD - num_classes)))

    kernel = functools.partial(
        _fused_conv_pool_fc_kernel,
        W=W, pad_rows=PADR, tile_rows_flat=TM, hw_total=H * W,
        c_out_pad=C_OUT_PAD)

    flops = 2 * B * H * W * 9 * C_in * C_OUT_PAD + 2 * B * C_OUT_PAD * NC_PAD
    bytes_accessed = int(
        x_fp.size * x_fp.dtype.itemsize
        + w_taps.size * w_taps.dtype.itemsize
        + mask_lr.size * mask_lr.dtype.itemsize
        + (cb.size + fw.size + fb.size + B * NC_PAD) * 4)

    out = pl.pallas_call(
        kernel,
        out_shape=jax.ShapeDtypeStruct((B, 1, NC_PAD), jnp.float32),
        grid=(B, n_rt),
        in_specs=[
            pl.BlockSpec((None, R, C_in), lambda b, rt: (b, 0, 0)),       # image
            pl.BlockSpec((2, TM, C_in), lambda b, rt: (0, rt, 0)),        # wrap masks
            pl.BlockSpec((9, C_in, C_OUT_PAD), lambda b, rt: (0, 0, 0)),  # conv w
            pl.BlockSpec((1, C_OUT_PAD), lambda b, rt: (0, 0)),           # conv b
            pl.BlockSpec((C_OUT_PAD, NC_PAD), lambda b, rt: (0, 0)),      # fc w
            pl.BlockSpec((1, NC_PAD), lambda b, rt: (0, 0)),              # fc b
        ],
        out_specs=pl.BlockSpec((None, 1, NC_PAD), lambda b, rt: (b, 0, 0)),
        scratch_shapes=[pltpu.VMEM((1, C_OUT_PAD), jnp.float32)],
        compiler_params=pltpu.CompilerParams(
            dimension_semantics=("parallel", "arbitrary"),
            vmem_limit_bytes=32 * 1024 * 1024),
        cost_estimate=pl.CostEstimate(
            flops=flops, transcendentals=0, bytes_accessed=bytes_accessed),
    )(x_fp, mask_lr, w_taps, cb, fw, fb)

    return out.reshape(B, NC_PAD)[:, :num_classes]


# ------------------------------ reference (JAX) ------------------------------

def forward_reference(data_dict, params):
    x = data_dict["image"].astype(jnp.float32)             # NCHW
    y = jax.lax.conv_general_dilated(
        x, params["conv_w"].astype(jnp.float32),
        window_strides=(1, 1), padding=((1, 1), (1, 1)),
        dimension_numbers=("NCHW", "OIHW", "NCHW"))
    y = jnp.maximum(y + params["conv_b"].reshape(1, -1, 1, 1), 0.0)
    pooled = jnp.mean(y, axis=(2, 3))                       # (B, C_out)
    return pooled @ params["fc_w"] + params["fc_b"]


# ----------------------------------- main ------------------------------------

if __name__ == "__main__":
    B, C_in, HW_SP = 2, 4, 16
    C_out, NUM_CLASSES = 8, 10

    key = jax.random.PRNGKey(0)
    k_img, k_cw, k_cb, k_fw, k_fb = jax.random.split(key, 5)

    image = jax.random.normal(k_img, (B, C_in, HW_SP, HW_SP), dtype=jnp.float32)
    params = {
        "conv_w": 0.1 * jax.random.normal(k_cw, (C_out, C_in, 3, 3), jnp.float32),
        "conv_b": 0.1 * jax.random.normal(k_cb, (C_out,), jnp.float32),
        "fc_w":   0.1 * jax.random.normal(k_fw, (C_out, NUM_CLASSES), jnp.float32),
        "fc_b":   0.1 * jax.random.normal(k_fb, (NUM_CLASSES,), jnp.float32),
    }
    data_dict = {"image": image}

    # tile_rows=8 -> 2 row-tiles per image, exercising the multi-step pooled-sum
    # accumulation (init / accumulate / finalize) path of the fused kernel.
    out = forward_image_model(data_dict, params, tile_rows=8)
    out = jax.block_until_ready(out)

    ref = forward_reference(data_dict, params)
    assert out.shape == (B, NUM_CLASSES)
    assert jnp.allclose(out, ref, atol=1e-4, rtol=1e-4), "mismatch vs reference"

    print("KERNEL_OK")
</pallas_src>

<mosaic_0001>
module attributes {stable_mosaic.version = 11 : i64} {
  func.func @_fused_conv_pool_fc_kernel(%arg0: i32, %arg1: i32, %arg2: memref<1x290x4xf32, #tpu.memory_space<vmem>>, %arg3: memref<2x128x4xf32, #tpu.memory_space<vmem>>, %arg4: memref<9x4x128xf32, #tpu.memory_space<vmem>>, %arg5: memref<1x128xf32, #tpu.memory_space<vmem>>, %arg6: memref<128x128xf32, #tpu.memory_space<vmem>>, %arg7: memref<1x128xf32, #tpu.memory_space<vmem>>, %arg8: memref<1x1x128xf32, #tpu.memory_space<vmem>>, %arg9: memref<1x128xf32, #tpu.memory_space<vmem>>) attributes {dimension_semantics = [#tpu.dimension_semantics<parallel>, #tpu.dimension_semantics<arbitrary>], iteration_bounds = array<i64: 2, 2>, scalar_prefetch = 0 : i64, scratch_operands = 1 : i64, tpu.core_type = #tpu.core_type<tc>, window_params = [{transform_indices = @transform_0, window_bounds = array<i64: 1, 290, 4>}, {transform_indices = @transform_1, window_bounds = array<i64: 2, 128, 4>}, {pipeline_mode = #tpu.pipeline_mode<synchronous>, transform_indices = @transform_2, window_bounds = array<i64: 9, 4, 128>}, {pipeline_mode = #tpu.pipeline_mode<synchronous>, transform_indices = @transform_3, window_bounds = array<i64: 1, 128>}, {pipeline_mode = #tpu.pipeline_mode<synchronous>, transform_indices = @transform_4, window_bounds = array<i64: 128, 128>}, {pipeline_mode = #tpu.pipeline_mode<synchronous>, transform_indices = @transform_5, window_bounds = array<i64: 1, 128>}, {transform_indices = @transform_6, window_bounds = array<i64: 1, 1, 128>}]} {
    %c0_i32 = arith.constant 0 : i32
    %0 = arith.cmpi eq, %arg1, %c0_i32 : i32
    %1 = arith.extui %0 : i1 to i32
    %c0_i32_0 = arith.constant 0 : i32
    %2 = arith.cmpi ne, %1, %c0_i32_0 : i32
    scf.if %2 {
      %cst_85 = arith.constant 0.000000e+00 : f32
      %118 = vector.broadcast %cst_85 : f32 to vector<1x128xf32>
      %c0_86 = arith.constant 0 : index
      %c0_87 = arith.constant 0 : index
      %119 = vector.load %arg9[%c0_86, %c0_87] : memref<1x128xf32, #tpu.memory_space<vmem>>, vector<1x128xf32>
      tpu.vector_store %arg9[%c0_86, %c0_87], %118 {strides = array<i32>} : memref<1x128xf32, #tpu.memory_space<vmem>>, vector<1x128xf32>,
    } else {
    }
    %c128_i32 = arith.constant 128 : i32
    %3 = arith.muli %arg1, %c128_i32 : i32
    %c0 = arith.constant 0 : index
    %c0_1 = arith.constant 0 : index
    %c0_2 = arith.constant 0 : index
    %4 = vector.load %arg3[%c0, %c0_1, %c0_2] : memref<2x128x4xf32, #tpu.memory_space<vmem>>, vector<1x128x4xf32>
    %5 = vector.shape_cast %4 : vector<1x128x4xf32> to vector<128x4xf32>
    %c1 = arith.constant 1 : index
    %c0_3 = arith.constant 0 : index
    %c0_4 = arith.constant 0 : index
    %6 = vector.load %arg3[%c1, %c0_3, %c0_4] : memref<2x128x4xf32, #tpu.memory_space<vmem>>, vector<1x128x4xf32>
    %7 = vector.shape_cast %6 : vector<1x128x4xf32> to vector<128x4xf32>
    %cst = arith.constant 0.000000e+00 : f32
    %8 = vector.broadcast %cst : f32 to vector<128x128xf32>
    %c17_i32 = arith.constant 17 : i32
    %9 = arith.addi %c17_i32, %3 : i32
    %c-16_i32 = arith.constant -16 : i32
    %10 = arith.addi %9, %c-16_i32 : i32
    %c-1_i32 = arith.constant -1 : i32
    %11 = arith.addi %10, %c-1_i32 : i32
    %c0_5 = arith.constant 0 : index
    %12 = arith.index_cast %11 : i32 to index
    %c0_6 = arith.constant 0 : index
    %13 = vector.load %arg2[%c0_5, %12, %c0_6] : memref<1x290x4xf32, #tpu.memory_space<vmem>>, vector<1x128x4xf32>
    %14 = vector.shape_cast %13 : vector<1x128x4xf32> to vector<128x4xf32>
    %15 = arith.mulf %14, %5 : vector<128x4xf32>
    %c0_7 = arith.constant 0 : index
    %c0_8 = arith.constant 0 : index
    %c0_9 = arith.constant 0 : index
    %16 = vector.load %arg4[%c0_7, %c0_8, %c0_9] : memref<9x4x128xf32, #tpu.memory_space<vmem>>, vector<1x4x128xf32>
    %17 = vector.shape_cast %16 : vector<1x4x128xf32> to vector<4x128xf32>
    %cst_10 = arith.constant dense<0.000000e+00> : vector<128x128xf32>
    %18 = tpu.matmul %15, %17, %cst_10 {dimension_numbers = #tpu.dot_dimension_numbers<[1], [0], [0], [1], [0, 0, 1, 1], [], []>} : vector<128x4xf32>, vector<4x128xf32>, vector<128x128xf32> -> vector<128x128xf32>
    %19 = arith.addf %8, %18 : vector<128x128xf32>
    %c17_i32_11 = arith.constant 17 : i32
    %20 = arith.addi %c17_i32_11, %3 : i32
    %c-16_i32_12 = arith.constant -16 : i32
    %21 = arith.addi %20, %c-16_i32_12 : i32
    %c0_i32_13 = arith.constant 0 : i32
    %22 = arith.addi %21, %c0_i32_13 : i32
    %c0_14 = arith.constant 0 : index
    %23 = arith.index_cast %22 : i32 to index
    %c0_15 = arith.constant 0 : index
    %24 = vector.load %arg2[%c0_14, %23, %c0_15] : memref<1x290x4xf32, #tpu.memory_space<vmem>>, vector<1x128x4xf32>
    %25 = vector.shape_cast %24 : vector<1x128x4xf32> to vector<128x4xf32>
    %c1_16 = arith.constant 1 : index
    %c0_17 = arith.constant 0 : index
    %c0_18 = arith.constant 0 : index
    %26 = vector.load %arg4[%c1_16, %c0_17, %c0_18] : memref<9x4x128xf32, #tpu.memory_space<vmem>>, vector<1x4x128xf32>
    %27 = vector.shape_cast %26 : vector<1x4x128xf32> to vector<4x128xf32>
    %cst_19 = arith.constant dense<0.000000e+00> : vector<128x128xf32>
    %28 = tpu.matmul %25, %27, %cst_19 {dimension_numbers = #tpu.dot_dimension_numbers<[1], [0], [0], [1], [0, 0, 1, 1], [], []>} : vector<128x4xf32>, vector<4x128xf32>, vector<128x128xf32> -> vector<128x128xf32>
    %29 = arith.addf %19, %28 : vector<128x128xf32>
    %c17_i32_20 = arith.constant 17 : i32
    %30 = arith.addi %c17_i32_20, %3 : i32
    %c-16_i32_21 = arith.constant -16 : i32
    %31 = arith.addi %30, %c-16_i32_21 : i32
    %c1_i32 = arith.constant 1 : i32
    %32 = arith.addi %31, %c1_i32 : i32
    %c0_22 = arith.constant 0 : index
    %33 = arith.index_cast %32 : i32 to index
    %c0_23 = arith.constant 0 : index
    %34 = vector.load %arg2[%c0_22, %33, %c0_23] : memref<1x290x4xf32, #tpu.memory_space<vmem>>, vector<1x128x4xf32>
    %35 = vector.shape_cast %34 : vector<1x128x4xf32> to vector<128x4xf32>
    %36 = arith.mulf %35, %7 : vector<128x4xf32>
    %c2 = arith.constant 2 : index
    %c0_24 = arith.constant 0 : index
    %c0_25 = arith.constant 0 : index
    %37 = vector.load %arg4[%c2, %c0_24, %c0_25] : memref<9x4x128xf32, #tpu.memory_space<vmem>>, vector<1x4x128xf32>
    %38 = vector.shape_cast %37 : vector<1x4x128xf32> to vector<4x128xf32>
    %cst_26 = arith.constant dense<0.000000e+00> : vector<128x128xf32>
    %39 = tpu.matmul %36, %38, %cst_26 {dimension_numbers = #tpu.dot_dimension_numbers<[1], [0], [0], [1], [0, 0, 1, 1], [], []>} : vector<128x4xf32>, vector<4x128xf32>, vector<128x128xf32> -> vector<128x128xf32>
    %40 = arith.addf %29, %39 : vector<128x128xf32>
    %c17_i32_27 = arith.constant 17 : i32
    %41 = arith.addi %c17_i32_27, %3 : i32
    %c0_i32_28 = arith.constant 0 : i32
    %42 = arith.addi %41, %c0_i32_28 : i32
    %c-1_i32_29 = arith.constant -1 : i32
    %43 = arith.addi %42, %c-1_i32_29 : i32
    %c0_30 = arith.constant 0 : index
    %44 = arith.index_cast %43 : i32 to index
    %c0_31 = arith.constant 0 : index
    %45 = vector.load %arg2[%c0_30, %44, %c0_31] : memref<1x290x4xf32, #tpu.memory_space<vmem>>, vector<1x128x4xf32>
    %46 = vector.shape_cast %45 : vector<1x128x4xf32> to vector<128x4xf32>
    %47 = arith.mulf %46, %5 : vector<128x4xf32>
    %c3 = arith.constant 3 : index
    %c0_32 = arith.constant 0 : index
    %c0_33 = arith.constant 0 : index
    %48 = vector.load %arg4[%c3, %c0_32, %c0_33] : memref<9x4x128xf32, #tpu.memory_space<vmem>>, vector<1x4x128xf32>
    %49 = vector.shape_cast %48 : vector<1x4x128xf32> to vector<4x128xf32>
    %cst_34 = arith.constant dense<0.000000e+00> : vector<128x128xf32>
    %50 = tpu.matmul %47, %49, %cst_34 {dimension_numbers = #tpu.dot_dimension_numbers<[1], [0], [0], [1], [0, 0, 1, 1], [], []>} : vector<128x4xf32>, vector<4x128xf32>, vector<128x128xf32> -> vector<128x128xf32>
    %51 = arith.addf %40, %50 : vector<128x128xf32>
    %c17_i32_35 = arith.constant 17 : i32
    %52 = arith.addi %c17_i32_35, %3 : i32
    %c0_i32_36 = arith.constant 0 : i32
    %53 = arith.addi %52, %c0_i32_36 : i32
    %c0_i32_37 = arith.constant 0 : i32
    %54 = arith.addi %53, %c0_i32_37 : i32
    %c0_38 = arith.constant 0 : index
    %55 = arith.index_cast %54 : i32 to index
    %c0_39 = arith.constant 0 : index
    %56 = vector.load %arg2[%c0_38, %55, %c0_39] : memref<1x290x4xf32, #tpu.memory_space<vmem>>, vector<1x128x4xf32>
    %57 = vector.shape_cast %56 : vector<1x128x4xf32> to vector<128x4xf32>
    %c4 = arith.constant 4 : index
    %c0_40 = arith.constant 0 : index
    %c0_41 = arith.constant 0 : index
    %58 = vector.load %arg4[%c4, %c0_40, %c0_41] : memref<9x4x128xf32, #tpu.memory_space<vmem>>, vector<1x4x128xf32>
    %59 = vector.shape_cast %58 : vector<1x4x128xf32> to vector<4x128xf32>
    %cst_42 = arith.constant dense<0.000000e+00> : vector<128x128xf32>
    %60 = tpu.matmul %57, %59, %cst_42 {dimension_numbers = #tpu.dot_dimension_numbers<[1], [0], [0], [1], [0, 0, 1, 1], [], []>} : vector<128x4xf32>, vector<4x128xf32>, vector<128x128xf32> -> vector<128x128xf32>
    %61 = arith.addf %51, %60 : vector<128x128xf32>
    %c17_i32_43 = arith.constant 17 : i32
    %62 = arith.addi %c17_i32_43, %3 : i32
    %c0_i32_44 = arith.constant 0 : i32
    %63 = arith.addi %62, %c0_i32_44 : i32
    %c1_i32_45 = arith.constant 1 : i32
    %64 = arith.addi %63, %c1_i32_45 : i32
    %c0_46 = arith.constant 0 : index
    %65 = arith.index_cast %64 : i32 to index
    %c0_47 = arith.constant 0 : index
    %66 = vector.load %arg2[%c0_46, %65, %c0_47] : memref<1x290x4xf32, #tpu.memory_space<vmem>>, vector<1x128x4xf32>
    %67 = vector.shape_cast %66 : vector<1x128x4xf32> to vector<128x4xf32>
    %68 = arith.mulf %67, %7 : vector<128x4xf32>
    %c5 = arith.constant 5 : index
    %c0_48 = arith.constant 0 : index
    %c0_49 = arith.constant 0 : index
    %69 = vector.load %arg4[%c5, %c0_48, %c0_49] : memref<9x4x128xf32, #tpu.memory_space<vmem>>, vector<1x4x128xf32>
    %70 = vector.shape_cast %69 : vector<1x4x128xf32> to vector<4x128xf32>
    %cst_50 = arith.constant dense<0.000000e+00> : vector<128x128xf32>
    %71 = tpu.matmul %68, %70, %cst_50 {dimension_numbers = #tpu.dot_dimension_numbers<[1], [0], [0], [1], [0, 0, 1, 1], [], []>} : vector<128x4xf32>, vector<4x128xf32>, vector<128x128xf32> -> vector<128x128xf32>
    %72 = arith.addf %61, %71 : vector<128x128xf32>
    %c17_i32_51 = arith.constant 17 : i32
    %73 = arith.addi %c17_i32_51, %3 : i32
    %c16_i32 = arith.constant 16 : i32
    %74 = arith.addi %73, %c16_i32 : i32
    %c-1_i32_52 = arith.constant -1 : i32
    %75 = arith.addi %74, %c-1_i32_52 : i32
    %c0_53 = arith.constant 0 : index
    %76 = arith.index_cast %75 : i32 to index
    %c0_54 = arith.constant 0 : index
    %77 = vector.load %arg2[%c0_53, %76, %c0_54] : memref<1x290x4xf32, #tpu.memory_space<vmem>>, vector<1x128x4xf32>
    %78 = vector.shape_cast %77 : vector<1x128x4xf32> to vector<128x4xf32>
    %79 = arith.mulf %78, %5 : vector<128x4xf32>
    %c6 = arith.constant 6 : index
    %c0_55 = arith.constant 0 : index
    %c0_56 = arith.constant 0 : index
    %80 = vector.load %arg4[%c6, %c0_55, %c0_56] : memref<9x4x128xf32, #tpu.memory_space<vmem>>, vector<1x4x128xf32>
    %81 = vector.shape_cast %80 : vector<1x4x128xf32> to vector<4x128xf32>
    %cst_57 = arith.constant dense<0.000000e+00> : vector<128x128xf32>
    %82 = tpu.matmul %79, %81, %cst_57 {dimension_numbers = #tpu.dot_dimension_numbers<[1], [0], [0], [1], [0, 0, 1, 1], [], []>} : vector<128x4xf32>, vector<4x128xf32>, vector<128x128xf32> -> vector<128x128xf32>
    %83 = arith.addf %72, %82 : vector<128x128xf32>
    %c17_i32_58 = arith.constant 17 : i32
    %84 = arith.addi %c17_i32_58, %3 : i32
    %c16_i32_59 = arith.constant 16 : i32
    %85 = arith.addi %84, %c16_i32_59 : i32
    %c0_i32_60 = arith.constant 0 : i32
    %86 = arith.addi %85, %c0_i32_60 : i32
    %c0_61 = arith.constant 0 : index
    %87 = arith.index_cast %86 : i32 to index
    %c0_62 = arith.constant 0 : index
    %88 = vector.load %arg2[%c0_61, %87, %c0_62] : memref<1x290x4xf32, #tpu.memory_space<vmem>>, vector<1x128x4xf32>
    %89 = vector.shape_cast %88 : vector<1x128x4xf32> to vector<128x4xf32>
    %c7 = arith.constant 7 : index
    %c0_63 = arith.constant 0 : index
    %c0_64 = arith.constant 0 : index
    %90 = vector.load %arg4[%c7, %c0_63, %c0_64] : memref<9x4x128xf32, #tpu.memory_space<vmem>>, vector<1x4x128xf32>
    %91 = vector.shape_cast %90 : vector<1x4x128xf32> to vector<4x128xf32>
    %cst_65 = arith.constant dense<0.000000e+00> : vector<128x128xf32>
    %92 = tpu.matmul %89, %91, %cst_65 {dimension_numbers = #tpu.dot_dimension_numbers<[1], [0], [0], [1], [0, 0, 1, 1], [], []>} : vector<128x4xf32>, vector<4x128xf32>, vector<128x128xf32> -> vector<128x128xf32>
    %93 = arith.addf %83, %92 : vector<128x128xf32>
    %c17_i32_66 = arith.constant 17 : i32
    %94 = arith.addi %c17_i32_66, %3 : i32
    %c16_i32_67 = arith.constant 16 : i32
    %95 = arith.addi %94, %c16_i32_67 : i32
    %c1_i32_68 = arith.constant 1 : i32
    %96 = arith.addi %95, %c1_i32_68 : i32
    %c0_69 = arith.constant 0 : index
    %97 = arith.index_cast %96 : i32 to index
    %c0_70 = arith.constant 0 : index
    %98 = vector.load %arg2[%c0_69, %97, %c0_70] : memref<1x290x4xf32, #tpu.memory_space<vmem>>, vector<1x128x4xf32>
    %99 = vector.shape_cast %98 : vector<1x128x4xf32> to vector<128x4xf32>
    %100 = arith.mulf %99, %7 : vector<128x4xf32>
    %c8 = arith.constant 8 : index
    %c0_71 = arith.constant 0 : index
    %c0_72 = arith.constant 0 : index
    %101 = vector.load %arg4[%c8, %c0_71, %c0_72] : memref<9x4x128xf32, #tpu.memory_space<vmem>>, vector<1x4x128xf32>
    %102 = vector.shape_cast %101 : vector<1x4x128xf32> to vector<4x128xf32>
    %cst_73 = arith.constant dense<0.000000e+00> : vector<128x128xf32>
    %103 = tpu.matmul %100, %102, %cst_73 {dimension_numbers = #tpu.dot_dimension_numbers<[1], [0], [0], [1], [0, 0, 1, 1], [], []>} : vector<128x4xf32>, vector<4x128xf32>, vector<128x128xf32> -> vector<128x128xf32>
    %104 = arith.addf %93, %103 : vector<128x128xf32>
    %c0_74 = arith.constant 0 : index
    %c0_75 = arith.constant 0 : index
    %105 = vector.load %arg5[%c0_74, %c0_75] : memref<1x128xf32, #tpu.memory_space<vmem>>, vector<1x128xf32>
    %106 = vector.broadcast %105 : vector<1x128xf32> to vector<128x128xf32>
    %107 = arith.addf %104, %106 : vector<128x128xf32>
    %cst_76 = arith.constant 0.000000e+00 : f32
    %108 = vector.broadcast %cst_76 : f32 to vector<128x128xf32>
    %109 = arith.maximumf %107, %108 : vector<128x128xf32>
    %cst_77 = arith.constant 1.000000e+00 : f32
    %110 = vector.broadcast %cst_77 : f32 to vector<1x128xf32>
    %c0_78 = arith.constant 0 : index
    %c0_79 = arith.constant 0 : index
    %111 = vector.load %arg9[%c0_78, %c0_79] : memref<1x128xf32, #tpu.memory_space<vmem>>, vector<1x128xf32>
    %cst_80 = arith.constant dense<0.000000e+00> : vector<1x128xf32>
    %112 = tpu.matmul %110, %109, %cst_80 {dimension_numbers = #tpu.dot_dimension_numbers<[1], [0], [0], [1], [0, 0, 1, 1], [], []>} : vector<1x128xf32>, vector<128x128xf32>, vector<1x128xf32> -> vector<1x128xf32>
    %113 = arith.addf %111, %112 : vector<1x128xf32>
    %c0_81 = arith.constant 0 : index
    %c0_82 = arith.constant 0 : index
    %114 = vector.load %arg9[%c0_81, %c0_82] : memref<1x128xf32, #tpu.memory_space<vmem>>, vector<1x128xf32>
    tpu.vector_store %arg9[%c0_81, %c0_82], %113 {strides = array<i32>} : memref<1x128xf32, #tpu.memory_space<vmem>>, vector<1x128xf32>,
    %c1_i32_83 = arith.constant 1 : i32
    %115 = arith.cmpi eq, %arg1, %c1_i32_83 : i32
    %116 = arith.extui %115 : i1 to i32
    %c0_i32_84 = arith.constant 0 : i32
    %117 = arith.cmpi ne, %116, %c0_i32_84 : i32
    scf.if %117 {
      %c0_85 = arith.constant 0 : index
      %c0_86 = arith.constant 0 : index
      %118 = vector.load %arg9[%c0_85, %c0_86] : memref<1x128xf32, #tpu.memory_space<vmem>>, vector<1x128xf32>
      %cst_87 = arith.constant 3.906250e-03 : f32
      %119 = vector.broadcast %cst_87 : f32 to vector<1x128xf32>
      %120 = arith.mulf %118, %119 : vector<1x128xf32>
      %c0_88 = arith.constant 0 : index
      %c0_89 = arith.constant 0 : index
      %121 = vector.load %arg6[%c0_88, %c0_89] : memref<128x128xf32, #tpu.memory_space<vmem>>, vector<128x128xf32>
      %cst_90 = arith.constant dense<0.000000e+00> : vector<1x128xf32>
      %122 = tpu.matmul %120, %121, %cst_90 {dimension_numbers = #tpu.dot_dimension_numbers<[1], [0], [0], [1], [0, 0, 1, 1], [], []>} : vector<1x128xf32>, vector<128x128xf32>, vector<1x128xf32> -> vector<1x128xf32>
      %c0_91 = arith.constant 0 : index
      %c0_92 = arith.constant 0 : index
      %123 = vector.load %arg7[%c0_91, %c0_92] : memref<1x128xf32, #tpu.memory_space<vmem>>, vector<1x128xf32>
      %124 = arith.addf %122, %123 : vector<1x128xf32>
      %c0_93 = arith.constant 0 : index
      %c0_94 = arith.constant 0 : index
      %c0_95 = arith.constant 0 : index
      %125 = vector.load %arg8[%c0_93, %c0_94, %c0_95] : memref<1x1x128xf32, #tpu.memory_space<vmem>>, vector<1x1x128xf32>
      %126 = vector.shape_cast %125 : vector<1x1x128xf32> to vector<1x128xf32>
      %127 = vector.shape_cast %124 : vector<1x128xf32> to vector<1x1x128xf32>
      tpu.vector_store %arg8[%c0_93, %c0_94, %c0_95], %127 {strides = array<i32>} : memref<1x1x128xf32, #tpu.memory_space<vmem>>, vector<1x1x128xf32>,
    } else {
    }
    return
  }
  func.func @transform_0(%arg0: i32, %arg1: i32) -> (i32, i32, i32) {
    %c0_i32 = arith.constant 0 : i32
    %c0_i32_0 = arith.constant 0 : i32
    %c0_i32_1 = arith.constant 0 : i32
    return %arg0, %c0_i32, %c0_i32_0 : i32, i32, i32
  }
  func.func @transform_1(%arg0: i32, %arg1: i32) -> (i32, i32, i32) {
    %c0_i32 = arith.constant 0 : i32
    %c0_i32_0 = arith.constant 0 : i32
    %c0_i32_1 = arith.constant 0 : i32
    return %c0_i32, %arg1, %c0_i32_0 : i32, i32, i32
  }
  func.func @transform_2(%arg0: i32, %arg1: i32) -> (i32, i32, i32) {
    %c0_i32 = arith.constant 0 : i32
    %c0_i32_0 = arith.constant 0 : i32
    %c0_i32_1 = arith.constant 0 : i32
    %c0_i32_2 = arith.constant 0 : i32
    return %c0_i32, %c0_i32_0, %c0_i32_1 : i32, i32, i32
  }
  func.func @transform_3(%arg0: i32, %arg1: i32) -> (i32, i32) {
    %c0_i32 = arith.constant 0 : i32
    %c0_i32_0 = arith.constant 0 : i32
    %c0_i32_1 = arith.constant 0 : i32
    return %c0_i32, %c0_i32_0 : i32, i32
  }
  func.func @transform_4(%arg0: i32, %arg1: i32) -> (i32, i32) {
    %c0_i32 = arith.constant 0 : i32
    %c0_i32_0 = arith.constant 0 : i32
    %c0_i32_1 = arith.constant 0 : i32
    return %c0_i32, %c0_i32_0 : i32, i32
  }
  func.func @transform_5(%arg0: i32, %arg1: i32) -> (i32, i32) {
    %c0_i32 = arith.constant 0 : i32
    %c0_i32_0 = arith.constant 0 : i32
    %c0_i32_1 = arith.constant 0 : i32
    return %c0_i32, %c0_i32_0 : i32, i32
  }
  func.func @transform_6(%arg0: i32, %arg1: i32) -> (i32, i32, i32) {
    %c0_i32 = arith.constant 0 : i32
    %c0_i32_0 = arith.constant 0 : i32
    %c0_i32_1 = arith.constant 0 : i32
    return %arg0, %c0_i32, %c0_i32_0 : i32, i32, i32
  }
}

</mosaic_0001>

<llo_original>
// kernel: tpu_custom_call.1
$region0: #{tpu_custom_call.1}
  #allocation0 [shape = 'u32[]', space=smem, size = 0x4, offset = 0x4, fixed_abs, tag = 'smem constant byte address 0x4 - core index']
  #allocation1 [shape = 'u32[144,128]{1,0:T(1,128)}', space=vmem, size = 0x12000, scoped, tag = 'internal scratch']
  #allocation2 [shape = 'f32[1,128]{1,0:T(1,128)}', space=vmem, size = 0x200, scoped, tag = 'scratch operand']
  %s0 = inlined_call_operand.vmem [shape: f32[2,290,4], index: 0, kind: input, shape index: {}]
  %s1 = inlined_call_operand.vmem [shape: f32[2,256,4], index: 1, kind: input, shape index: {}]
  %s2 = inlined_call_operand.vmem [shape: f32[9,4,128], index: 2, kind: input, shape index: {}]
  %s3 = inlined_call_operand.vmem [shape: f32[1,128], index: 3, kind: input, shape index: {}]
  %s4 = inlined_call_operand.vmem [shape: f32[128,128], index: 4, kind: input, shape index: {}]
  %s5 = inlined_call_operand.vmem [shape: f32[1,128], index: 5, kind: input, shape index: {}]
  %s6 = inlined_call_operand.hbm [shape: f32[2,1,128], index: 6, kind: output, shape index: {}]
  %s7 = sld [smem:[#allocation0]]
  $region103: #{tpu_custom_call.1} parent=0
    _
  %s9 = ssub.s32 1, %s7
  %s10 = scalar_select 0, %s9, %s7
  $region1: #{tpu_custom_call.1} parent=0
    #allocation3 [shape = 'u8[262144]{0}', space=vmem, size = 0x40000, scoped, tag = 'input window, operand 1']
    #allocation4 [shape = 'u8[1024]{0}', space=vmem, size = 0x400, scoped, tag = 'output window, operand 0']
    #allocation5 [shape = 's32[2]{0}', space=sflag, size = 0x8, scoped, tag = 'scoped memory for tpu_custom_call.1']
    %11 = vsyncpa [#allocation5], 0
    %s12 = scalar_lea.sflag [#allocation5], 1
    %13 = vsyncpa %s12, 0
    loop: start=0, step=1, limit=6
    $region2: #{tpu_custom_call.1} parent=1 // loop_pre_header
      _
    $region3: #{tpu_custom_call.1} parent=1 // loop_header
      %s15 = sphi 0, %s19
      %p16 = scmp.ge.s32.totalorder %s15, 6
      %s22 = sphi 0, %s34
      %s23 = sphi 0, %s30
      %s24 = sphi 0, %s22
      %s25 = sphi 0, %s23
      %s26 = sphi 0, %s24
      %s27 = sphi 0, %s25
      %s37 = sphi 0, %s39
      %s40 = sphi 0, %s37
      %s41 = sphi 0, %s40
      %s57 = sphi 0, %s41
      %s63 = sphi 0, %s65
      %s66 = sphi 0, %s63
      %s67 = sphi 0, %s66
      %s83 = sphi 0, %s67
      %s87 = sphi 0, %s87
      %s89 = sphi 0, %s87
      %s90 = sphi 0, %s89
      %s104 = sphi 0, %s90
      %s108 = sphi 0, %s108
      %s110 = sphi 0, %s108
      %s111 = sphi 0, %s110
      %s125 = sphi 0, %s111
      %s129 = sphi 0, %s129
      %s131 = sphi 0, %s129
      %s132 = sphi 0, %s131
      %s146 = sphi 0, %s132
      %s150 = sphi 0, %s150
      %s152 = sphi 0, %s150
      %s153 = sphi 0, %s152
      %s167 = sphi 0, %s153
      %s173 = sphi 0, %s175
      %s176 = sphi 0, %s173
      %s177 = sphi 0, %s176
      %s193 = sphi 0, %s177
    $region4: #{tpu_custom_call.1} parent=1 // loop_header_branch
      %18 = sbr.rel (%p16) target = $region8
    $region5: #{tpu_custom_call.1} parent=1 // loop_body
      %s20 = ssub.s32 %s15, 1
      %s21 = ssub.s32 %s15, 2
      %s28 = sadd.s32 1, %s23
      %p29 = scmp.ge.s32.totalorder %s28, 2
      %s30 = scalar_select %p29, 0, %s28
      %s31 = sadd.s32 1, %s22
      %s32 = scalar_select %p29, %s31, %s22
      %p33 = scmp.ge.s32.totalorder %s32, 2
      %s34 = scalar_select %p33, 0, %s32
      %s35 = ssub.s32 %s22, %s34
      %p36 = scmp.eq.s32.totalorder %s35, 0
      %s38 = sadd.s32 %s37, 1
      %s39 = scalar_select %p36, %s37, %s38
      %p42 = pneg %p36
      %p43 = scmp.eq.s32.totalorder %s15, 3
      %p44 = por %p42, %p43
      %p45 = scmp.ne.s32.totalorder %s37, %s40
      %p46 = scmp.eq.s32.totalorder %s15, 0
      %p47 = por %p45, %p46
      %p48 = scmp.ne.s32.totalorder %s37, %s40
      %p49 = scmp.eq.s32.totalorder %s20, 3
      %p50 = por %p48, %p49
      %p51 = scmp.ne.s32.totalorder %s40, %s41
      %p52 = scmp.eq.s32.totalorder %s20, 0
      %p53 = por %p51, %p52
      %p54 = scmp.ne.s32.totalorder %s40, %s41
      %p55 = scmp.eq.s32.totalorder %s21, 3
      %p56 = por %p54, %p55
      %p58 = scmp.ne.s32.totalorder %s41, %s57
      %p59 = scmp.eq.s32.totalorder %s21, 0
      %p60 = por %p58, %p59
      %s61 = ssub.s32 %s23, %s30
      %p62 = scmp.eq.s32.totalorder %s61, 0
      %s64 = sadd.s32 %s63, 1
      %s65 = scalar_select %p62, %s63, %s64
      %p68 = pneg %p62
      %p69 = scmp.eq.s32.totalorder %s15, 3
      %p70 = por %p68, %p69
      %p71 = scmp.ne.s32.totalorder %s63, %s66
      %p72 = scmp.eq.s32.totalorder %s15, 0
      %p73 = por %p71, %p72
      %p74 = scmp.ne.s32.totalorder %s63, %s66
      %p75 = scmp.eq.s32.totalorder %s20, 3
      %p76 = por %p74, %p75
      %p77 = scmp.ne.s32.totalorder %s66, %s67
      %p78 = scmp.eq.s32.totalorder %s20, 0
      %p79 = por %p77, %p78
      %p80 = scmp.ne.s32.totalorder %s66, %s67
      %p81 = scmp.eq.s32.totalorder %s21, 3
      %p82 = por %p80, %p81
      %p84 = scmp.ne.s32.totalorder %s67, %s83
      %p85 = scmp.eq.s32.totalorder %s21, 0
      %p86 = por %p84, %p85
      %s88 = sadd.s32 %s87, 1
      %p91 = scmp.eq.s32.totalorder %s15, 3
      %p92 = scmp.ne.s32.totalorder %s87, %s89
      %p93 = scmp.eq.s32.totalorder %s15, 0
      %p94 = por %p92, %p93
      %p95 = scmp.ne.s32.totalorder %s87, %s89
      %p96 = scmp.eq.s32.totalorder %s20, 3
      %p97 = por %p95, %p96
      %p98 = scmp.ne.s32.totalorder %s89, %s90
      %p99 = scmp.eq.s32.totalorder %s20, 0
      %p100 = por %p98, %p99
      %p101 = scmp.ne.s32.totalorder %s89, %s90
      %p102 = scmp.eq.s32.totalorder %s21, 3
      %p103 = por %p101, %p102
      %p105 = scmp.ne.s32.totalorder %s90, %s104
      %p106 = scmp.eq.s32.totalorder %s21, 0
      %p107 = por %p105, %p106
      %s109 = sadd.s32 %s108, 1
      %p112 = scmp.eq.s32.totalorder %s15, 3
      %p113 = scmp.ne.s32.totalorder %s108, %s110
      %p114 = scmp.eq.s32.totalorder %s15, 0
      %p115 = por %p113, %p114
      %p116 = scmp.ne.s32.totalorder %s108, %s110
      %p117 = scmp.eq.s32.totalorder %s20, 3
      %p118 = por %p116, %p117
      %p119 = scmp.ne.s32.totalorder %s110, %s111
      %p120 = scmp.eq.s32.totalorder %s20, 0
      %p121 = por %p119, %p120
      %p122 = scmp.ne.s32.totalorder %s110, %s111
      %p123 = scmp.eq.s32.totalorder %s21, 3
      %p124 = por %p122, %p123
      %p126 = scmp.ne.s32.totalorder %s111, %s125
      %p127 = scmp.eq.s32.totalorder %s21, 0
      %p128 = por %p126, %p127
      %s130 = sadd.s32 %s129, 1
      %p133 = scmp.eq.s32.totalorder %s15, 3
      %p134 = scmp.ne.s32.totalorder %s129, %s131
      %p135 = scmp.eq.s32.totalorder %s15, 0
      %p136 = por %p134, %p135
      %p137 = scmp.ne.s32.totalorder %s129, %s131
      %p138 = scmp.eq.s32.totalorder %s20, 3
      %p139 = por %p137, %p138
      %p140 = scmp.ne.s32.totalorder %s131, %s132
      %p141 = scmp.eq.s32.totalorder %s20, 0
      %p142 = por %p140, %p141
      %p143 = scmp.ne.s32.totalorder %s131, %s132
      %p144 = scmp.eq.s32.totalorder %s21, 3
      %p145 = por %p143, %p144
      %p147 = scmp.ne.s32.totalorder %s132, %s146
      %p148 = scmp.eq.s32.totalorder %s21, 0
      %p149 = por %p147, %p148
      %s151 = sadd.s32 %s150, 1
      %p154 = scmp.eq.s32.totalorder %s15, 3
      %p155 = scmp.ne.s32.totalorder %s150, %s152
      %p156 = scmp.eq.s32.totalorder %s15, 0
      %p157 = por %p155, %p156
      %p158 = scmp.ne.s32.totalorder %s150, %s152
      %p159 = scmp.eq.s32.totalorder %s20, 3
      %p160 = por %p158, %p159
      %p161 = scmp.ne.s32.totalorder %s152, %s153
      %p162 = scmp.eq.s32.totalorder %s20, 0
      %p163 = por %p161, %p162
      %p164 = scmp.ne.s32.totalorder %s152, %s153
      %p165 = scmp.eq.s32.totalorder %s21, 3
      %p166 = por %p164, %p165
      %p168 = scmp.ne.s32.totalorder %s153, %s167
      %p169 = scmp.eq.s32.totalorder %s21, 0
      %p170 = por %p168, %p169
      %s171 = ssub.s32 %s22, %s34
      %p172 = scmp.eq.s32.totalorder %s171, 0
      %s174 = sadd.s32 %s173, 1
      %s175 = scalar_select %p172, %s173, %s174
      %p178 = pneg %p172
      %p179 = scmp.eq.s32.totalorder %s15, 3
      %p180 = por %p178, %p179
      %p181 = scmp.ne.s32.totalorder %s173, %s176
      %p182 = scmp.eq.s32.totalorder %s15, 0
      %p183 = por %p181, %p182
      %p184 = scmp.ne.s32.totalorder %s173, %s176
      %p185 = scmp.eq.s32.totalorder %s20, 3
      %p186 = por %p184, %p185
      %p187 = scmp.ne.s32.totalorder %s176, %s177
      %p188 = scmp.eq.s32.totalorder %s20, 0
      %p189 = por %p187, %p188
      %p190 = scmp.ne.s32.totalorder %s176, %s177
      %p191 = scmp.eq.s32.totalorder %s21, 3
      %p192 = por %p190, %p191
      %p194 = scmp.ne.s32.totalorder %s177, %s193
      %p195 = scmp.eq.s32.totalorder %s21, 0
      %p196 = por %p194, %p195
      %p197 = scmp.le.s32.totalorder 1, %s15
      %p198 = scmp.lt.s32.totalorder %s15, 5
      %p199 = pnand %p197, %p198
      %p200 = pneg %p199
      // Predicated region
      $region9: #{tpu_custom_call.1} parent=5 // pred_check
        _
      $region10: #{tpu_custom_call.1} parent=5 // pred_check_branch
        %202 = sbr.rel (%p199) target = $region12
      $region11: #{tpu_custom_call.1} parent=5 // pred_region
        %s203 = ssub.s32 %s15, 1
        // Predicated region
        $region13: #{tpu_custom_call.1} parent=11 // pred_check
          %p204 = pneg %p100
        $region14: #{tpu_custom_call.1} parent=11 // pred_check_branch
          %206 = sbr.rel (%p204) target = $region16
        $region15: #{tpu_custom_call.1} parent=11 // pred_region
          _
        $region16: #{tpu_custom_call.1} parent=11 // pred_fallthru
          _
        // Predicated region
        $region17: #{tpu_custom_call.1} parent=11 // pred_check
          %p207 = pneg %p121
        $region18: #{tpu_custom_call.1} parent=11 // pred_check_branch
          %209 = sbr.rel (%p207) target = $region20
        $region19: #{tpu_custom_call.1} parent=11 // pred_region
          _
        $region20: #{tpu_custom_call.1} parent=11 // pred_fallthru
          _
        // Predicated region
        $region21: #{tpu_custom_call.1} parent=11 // pred_check
          %p210 = pneg %p142
        $region22: #{tpu_custom_call.1} parent=11 // pred_check_branch
          %212 = sbr.rel (%p210) target = $region24
        $region23: #{tpu_custom_call.1} parent=11 // pred_region
          _
        $region24: #{tpu_custom_call.1} parent=11 // pred_fallthru
          _
        // Predicated region
        $region25: #{tpu_custom_call.1} parent=11 // pred_check
          %p213 = pneg %p163
        $region26: #{tpu_custom_call.1} parent=11 // pred_check_branch
          %215 = sbr.rel (%p213) target = $region28
        $region27: #{tpu_custom_call.1} parent=11 // pred_region
          _
        $region28: #{tpu_custom_call.1} parent=11 // pred_fallthru
          _
      $region12: #{tpu_custom_call.1} parent=5 // pred_fallthru
        _
      %p216 = scmp.lt.s32.totalorder %s15, 4
      // Predicated region
      $region29: #{tpu_custom_call.1} parent=5 // pred_check
        %p217 = pneg %p216
      $region30: #{tpu_custom_call.1} parent=5 // pred_check_branch
        %219 = sbr.rel (%p217) target = $region32
      $region31: #{tpu_custom_call.1} parent=5 // pred_region
        // Predicated region
        $region33: #{tpu_custom_call.1} parent=31 // pred_check
          %p220 = pneg %p47
        $region34: #{tpu_custom_call.1} parent=31 // pred_check_branch
          %222 = sbr.rel (%p220) target = $region36
        $region35: #{tpu_custom_call.1} parent=31 // pred_region
          %p223 = scmp.lt.s32.totalorder %s22, 1
          %s224 = scalar_select %p223, %s22, 1
          %s225 = smul.addr %s224, 37
          %s226 = smul.addr %s225, 8
          %s227 = scalar_lea.vmem %s0, %s226
        $region36: #{tpu_custom_call.1} parent=31 // pred_fallthru
          _
        // Predicated region
        $region37: #{tpu_custom_call.1} parent=31 // pred_check
          %p228 = pneg %p73
        $region38: #{tpu_custom_call.1} parent=31 // pred_check_branch
          %230 = sbr.rel (%p228) target = $region40
        $region39: #{tpu_custom_call.1} parent=31 // pred_region
          %s231 = sand.u32 %s63, 1
          %s232 = sand.u32 %s63, 1
          %s233 = smul.addr %s232, 256
          %s234 = scalar_lea.vmem [#allocation3], %s233
          %s235 = smul.u32 16, %s23
          %s236 = smul.addr %s235, 8
          %s237 = scalar_lea.vmem %s1, %s236
          // Predicated region
          $region41: #{tpu_custom_call.1} parent=39 // pred_check
            _
          $region42: #{tpu_custom_call.1} parent=39 // pred_check_branch
            %239 = sbr.rel (0) target = $region44
          $region43: #{tpu_custom_call.1} parent=39 // pred_region
            // Predicated region
            $region45: #{tpu_custom_call.1} parent=43 // pred_check
              _
            $region46: #{tpu_custom_call.1} parent=43 // pred_check_branch
              %241 = sbr.rel (0) target = $region48
            $region47: #{tpu_custom_call.1} parent=43 // pred_region
              // Predicated region
              $region60: #{tpu_custom_call.1} parent=47 // pred_check
                _
              $region61: #{tpu_custom_call.1} parent=47 // pred_check_branch
                %319 = sbr.rel (0) target = $region63
              $region62: #{tpu_custom_call.1} parent=47 // pred_region
                loop: start=0, step=1, limit=1
                $region64: #{tpu_custom_call.1} parent=62 // loop_pre_header
                  _
                $region65: #{tpu_custom_call.1} parent=62 // loop_header
                  %s321 = sphi 0, %s325
                  %p322 = scmp.ge.s32.totalorder %s321, 1
                  %s326 = sphi %s237, %s237
                  %s327 = sphi %s234, %s234
                $region66: #{tpu_custom_call.1} parent=62 // loop_header_branch
                  %324 = sbr.rel (%p322) target = $region70
                $region67: #{tpu_custom_call.1} parent=62 // loop_body
                  %v328 = vld [vmem:[%s326] sm:$0xff]
                  %329 = vst [vmem:[%s327] sm:$0xff] %v328
                  %v330 = vld [vmem:[%s326 + $0x8] sm:$0xff]
                  %331 = vst [vmem:[%s327 + $0x8] sm:$0xff] %v330
                  %v332 = vld [vmem:[%s326 + $0x10] sm:$0xff]
                  %333 = vst [vmem:[%s327 + $0x10] sm:$0xff] %v332
                  %v334 = vld [vmem:[%s326 + $0x18] sm:$0xff]
                  %335 = vst [vmem:[%s327 + $0x18] sm:$0xff] %v334
                  %v336 = vld [vmem:[%s326 + $0x20] sm:$0xff]
                  %337 = vst [vmem:[%s327 + $0x20] sm:$0xff] %v336
                  %v338 = vld [vmem:[%s326 + $0x28] sm:$0xff]
                  %339 = vst [vmem:[%s327 + $0x28] sm:$0xff] %v338
                  %v340 = vld [vmem:[%s326 + $0x30] sm:$0xff]
                  %341 = vst [vmem:[%s327 + $0x30] sm:$0xff] %v340
                  %v342 = vld [vmem:[%s326 + $0x38] sm:$0xff]
                  %343 = vst [vmem:[%s327 + $0x38] sm:$0xff] %v342
                  %v344 = vld [vmem:[%s326 + $0x40] sm:$0xff]
                  %345 = vst [vmem:[%s327 + $0x40] sm:$0xff] %v344
                  %v346 = vld [vmem:[%s326 + $0x48] sm:$0xff]
                  %347 = vst [vmem:[%s327 + $0x48] sm:$0xff] %v346
                  %v348 = vld [vmem:[%s326 + $0x50] sm:$0xff]
                  %349 = vst [vmem:[%s327 + $0x50] sm:$0xff] %v348
                  %v350 = vld [vmem:[%s326 + $0x58] sm:$0xff]
                  %351 = vst [vmem:[%s327 + $0x58] sm:$0xff] %v350
                  %v352 = vld [vmem:[%s326 + $0x60] sm:$0xff]
                  %353 = vst [vmem:[%s327 + $0x60] sm:$0xff] %v352
                  %v354 = vld [vmem:[%s326 + $0x68] sm:$0xff]
                  %355 = vst [vmem:[%s327 + $0x68] sm:$0xff] %v354
                  %v356 = vld [vmem:[%s326 + $0x70] sm:$0xff]
                  %357 = vst [vmem:[%s327 + $0x70] sm:$0xff] %v356
                  %v358 = vld [vmem:[%s326 + $0x78] sm:$0xff]
                  %359 = vst [vmem:[%s327 + $0x78] sm:$0xff] %v358
                  %v360 = vld [vmem:[%s326 + $0x100] sm:$0xff]
                  %361 = vst [vmem:[%s327 + $0x80] sm:$0xff] %v360
                  %v362 = vld [vmem:[%s326 + $0x108] sm:$0xff]
                  %363 = vst [vmem:[%s327 + $0x88] sm:$0xff] %v362
                  %v364 = vld [vmem:[%s326 + $0x110] sm:$0xff]
                  %365 = vst [vmem:[%s327 + $0x90] sm:$0xff] %v364
                  %v366 = vld [vmem:[%s326 + $0x118] sm:$0xff]
                  %367 = vst [vmem:[%s327 + $0x98] sm:$0xff] %v366
                  %v368 = vld [vmem:[%s326 + $0x120] sm:$0xff]
                  %369 = vst [vmem:[%s327 + $0xa0] sm:$0xff] %v368
                  %v370 = vld [vmem:[%s326 + $0x128] sm:$0xff]
                  %371 = vst [vmem:[%s327 + $0xa8] sm:$0xff] %v370
                  %v372 = vld [vmem:[%s326 + $0x130] sm:$0xff]
                  %373 = vst [vmem:[%s327 + $0xb0] sm:$0xff] %v372
                  %v374 = vld [vmem:[%s326 + $0x138] sm:$0xff]
                  %375 = vst [vmem:[%s327 + $0xb8] sm:$0xff] %v374
                  %v376 = vld [vmem:[%s326 + $0x140] sm:$0xff]
                  %377 = vst [vmem:[%s327 + $0xc0] sm:$0xff] %v376
                  %v378 = vld [vmem:[%s326 + $0x148] sm:$0xff]
                  %379 = vst [vmem:[%s327 + $0xc8] sm:$0xff] %v378
                  %v380 = vld [vmem:[%s326 + $0x150] sm:$0xff]
                  %381 = vst [vmem:[%s327 + $0xd0] sm:$0xff] %v380
                  %v382 = vld [vmem:[%s326 + $0x158] sm:$0xff]
                  %383 = vst [vmem:[%s327 + $0xd8] sm:$0xff] %v382
                  %v384 = vld [vmem:[%s326 + $0x160] sm:$0xff]
                  %385 = vst [vmem:[%s327 + $0xe0] sm:$0xff] %v384
                  %v386 = vld [vmem:[%s326 + $0x168] sm:$0xff]
                  %387 = vst [vmem:[%s327 + $0xe8] sm:$0xff] %v386
                  %v388 = vld [vmem:[%s326 + $0x170] sm:$0xff]
                  %389 = vst [vmem:[%s327 + $0xf0] sm:$0xff] %v388
                  %v390 = vld [vmem:[%s326 + $0x178] sm:$0xff]
                  %391 = vst [vmem:[%s327 + $0xf8] sm:$0xff] %v390
                $region68: #{tpu_custom_call.1} parent=62 // loop_footer
                  %s325 = sadd.s32 1, %s321
                $region69: #{tpu_custom_call.1} parent=62 // loop_footer_branch
                  %320 = sbr.rel target = $region65
                $region70: #{tpu_custom_call.1} parent=62 // loop_exit
                  _
              $region63: #{tpu_custom_call.1} parent=47 // pred_fallthru
                _
              // Predicated region
              $region71: #{tpu_custom_call.1} parent=47 // pred_check
                _
              $region72: #{tpu_custom_call.1} parent=47 // pred_check_branch
                %393 = sbr.rel target = $region74
              $region73: #{tpu_custom_call.1} parent=47 // pred_region
                _
              $region74: #{tpu_custom_call.1} parent=47 // pred_fallthru
                _
            $region48: #{tpu_custom_call.1} parent=43 // pred_fallthru
              _
            // Predicated region
            $region49: #{tpu_custom_call.1} parent=43 // pred_check
              _
            $region50: #{tpu_custom_call.1} parent=43 // pred_check_branch
              %243 = sbr.rel target = $region52
            $region51: #{tpu_custom_call.1} parent=43 // pred_region
              %s245 = ssub.s32 256, 1
              loop: start=0, step=1, limit=1
              $region53: #{tpu_custom_call.1} parent=51 // loop_pre_header
                _
              $region54: #{tpu_custom_call.1} parent=51 // loop_header
                %s247 = sphi 0, %s251
                %p248 = scmp.ge.s32.totalorder %s247, 1
                %s252 = sphi %s237, %s237
                %s253 = sphi %s234, %s234
              $region55: #{tpu_custom_call.1} parent=51 // loop_header_branch
                %250 = sbr.rel (%p248) target = $region59
              $region56: #{tpu_custom_call.1} parent=51 // loop_body
                %v254 = vld [vmem:[%s252] sm:%s245]
                %255 = vst [vmem:[%s253] sm:%s245] %v254
                %v256 = vld [vmem:[%s252 + $0x8] sm:%s245]
                %257 = vst [vmem:[%s253 + $0x8] sm:%s245] %v256
                %v258 = vld [vmem:[%s252 + $0x10] sm:%s245]
                %259 = vst [vmem:[%s253 + $0x10] sm:%s245] %v258
                %v260 = vld [vmem:[%s252 + $0x18] sm:%s245]
                %261 = vst [vmem:[%s253 + $0x18] sm:%s245] %v260
                %v262 = vld [vmem:[%s252 + $0x20] sm:%s245]
                %263 = vst [vmem:[%s253 + $0x20] sm:%s245] %v262
                %v264 = vld [vmem:[%s252 + $0x28] sm:%s245]
                %265 = vst [vmem:[%s253 + $0x28] sm:%s245] %v264
                %v266 = vld [vmem:[%s252 + $0x30] sm:%s245]
                %267 = vst [vmem:[%s253 + $0x30] sm:%s245] %v266
                %v268 = vld [vmem:[%s252 + $0x38] sm:%s245]
                %269 = vst [vmem:[%s253 + $0x38] sm:%s245] %v268
                %v270 = vld [vmem:[%s252 + $0x40] sm:%s245]
                %271 = vst [vmem:[%s253 + $0x40] sm:%s245] %v270
                %v272 = vld [vmem:[%s252 + $0x48] sm:%s245]
                %273 = vst [vmem:[%s253 + $0x48] sm:%s245] %v272
                %v274 = vld [vmem:[%s252 + $0x50] sm:%s245]
                %275 = vst [vmem:[%s253 + $0x50] sm:%s245] %v274
                %v276 = vld [vmem:[%s252 + $0x58] sm:%s245]
                %277 = vst [vmem:[%s253 + $0x58] sm:%s245] %v276
                %v278 = vld [vmem:[%s252 + $0x60] sm:%s245]
                %279 = vst [vmem:[%s253 + $0x60] sm:%s245] %v278
                %v280 = vld [vmem:[%s252 + $0x68] sm:%s245]
                %281 = vst [vmem:[%s253 + $0x68] sm:%s245] %v280
                %v282 = vld [vmem:[%s252 + $0x70] sm:%s245]
                %283 = vst [vmem:[%s253 + $0x70] sm:%s245] %v282
                %v284 = vld [vmem:[%s252 + $0x78] sm:%s245]
                %285 = vst [vmem:[%s253 + $0x78] sm:%s245] %v284
                %v286 = vld [vmem:[%s252 + $0x100] sm:%s245]
                %287 = vst [vmem:[%s253 + $0x80] sm:%s245] %v286
                %v288 = vld [vmem:[%s252 + $0x108] sm:%s245]
                %289 = vst [vmem:[%s253 + $0x88] sm:%s245] %v288
                %v290 = vld [vmem:[%s252 + $0x110] sm:%s245]
                %291 = vst [vmem:[%s253 + $0x90] sm:%s245] %v290
                %v292 = vld [vmem:[%s252 + $0x118] sm:%s245]
                %293 = vst [vmem:[%s253 + $0x98] sm:%s245] %v292
                %v294 = vld [vmem:[%s252 + $0x120] sm:%s245]
                %295 = vst [vmem:[%s253 + $0xa0] sm:%s245] %v294
                %v296 = vld [vmem:[%s252 + $0x128] sm:%s245]
                %297 = vst [vmem:[%s253 + $0xa8] sm:%s245] %v296
                %v298 = vld [vmem:[%s252 + $0x130] sm:%s245]
                %299 = vst [vmem:[%s253 + $0xb0] sm:%s245] %v298
                %v300 = vld [vmem:[%s252 + $0x138] sm:%s245]
                %301 = vst [vmem:[%s253 + $0xb8] sm:%s245] %v300
                %v302 = vld [vmem:[%s252 + $0x140] sm:%s245]
                %303 = vst [vmem:[%s253 + $0xc0] sm:%s245] %v302
                %v304 = vld [vmem:[%s252 + $0x148] sm:%s245]
                %305 = vst [vmem:[%s253 + $0xc8] sm:%s245] %v304
                %v306 = vld [vmem:[%s252 + $0x150] sm:%s245]
                %307 = vst [vmem:[%s253 + $0xd0] sm:%s245] %v306
                %v308 = vld [vmem:[%s252 + $0x158] sm:%s245]
                %309 = vst [vmem:[%s253 + $0xd8] sm:%s245] %v308
                %v310 = vld [vmem:[%s252 + $0x160] sm:%s245]
                %311 = vst [vmem:[%s253 + $0xe0] sm:%s245] %v310
                %v312 = vld [vmem:[%s252 + $0x168] sm:%s245]
                %313 = vst [vmem:[%s253 + $0xe8] sm:%s245] %v312
                %v314 = vld [vmem:[%s252 + $0x170] sm:%s245]
                %315 = vst [vmem:[%s253 + $0xf0] sm:%s245] %v314
                %v316 = vld [vmem:[%s252 + $0x178] sm:%s245]
                %317 = vst [vmem:[%s253 + $0xf8] sm:%s245] %v316
              $region57: #{tpu_custom_call.1} parent=51 // loop_footer
                %s251 = sadd.s32 1, %s247
              $region58: #{tpu_custom_call.1} parent=51 // loop_footer_branch
                %246 = sbr.rel target = $region54
              $region59: #{tpu_custom_call.1} parent=51 // loop_exit
                _
            $region52: #{tpu_custom_call.1} parent=43 // pred_fallthru
              _
          $region44: #{tpu_custom_call.1} parent=39 // pred_fallthru
            _
          %394 = vnop
        $region40: #{tpu_custom_call.1} parent=31 // pred_fallthru
          _
      $region32: #{tpu_custom_call.1} parent=5 // pred_fallthru
        _
      %p395 = scmp.le.s32.totalorder 1, %s15
      %p396 = scmp.lt.s32.totalorder %s15, 5
      %p397 = pnand %p395, %p396
      %p398 = pneg %p397
      // Predicated region
      $region75: #{tpu_custom_call.1} parent=5 // pred_check
        _
      $region76: #{tpu_custom_call.1} parent=5 // pred_check_branch
        %400 = sbr.rel (%p397) target = $region78
      $region77: #{tpu_custom_call.1} parent=5 // pred_region
        %s401 = ssub.s32 %s15, 1
        %s402 = sand.u32 %s66, 1
        %s403 = sand.u32 %s66, 1
        %s404 = smul.addr %s403, 256
        %s405 = scalar_lea.vmem [#allocation3], %s404
        // Predicated region
        $region79: #{tpu_custom_call.1} parent=77 // pred_check
          %p406 = pneg %p79
        $region80: #{tpu_custom_call.1} parent=77 // pred_check_branch
          %408 = sbr.rel (%p406) target = $region82
        $region81: #{tpu_custom_call.1} parent=77 // pred_region
          _
        $region82: #{tpu_custom_call.1} parent=77 // pred_fallthru
          _
        %p409 = scmp.lt.s32.totalorder %s24, 1
        %s410 = scalar_select %p409, %s24, 1
        %s411 = smul.addr %s410, 37
        %s412 = smul.addr %s411, 8
        %s413 = scalar_lea.vmem %s0, %s412
        %p414 = pneg %p53
        %p415 = pneg %p50
        %s416 = sand.u32 %s66, 1
        %s417 = sand.u32 %s66, 1
        %s418 = smul.addr %s417, 256
        %s419 = scalar_lea.vmem [#allocation3], %s418
        %p420 = pneg %p79
        %p421 = pneg %p76
        %p422 = pneg %p100
        %p423 = pneg %p97
        %p424 = pneg %p121
        %p425 = pneg %p118
        %p426 = pneg %p142
        %p427 = pneg %p139
        %p428 = pneg %p163
        %p429 = pneg %p160
        %p430 = pneg %p189
        %p431 = pneg %p186
        %s432 = sand.u32 %s176, 1
        %s433 = scalar_lea.sflag [#allocation5], %s432
        %s434 = sand.u32 %s176, 1
        %s435 = scalar_lea.vmem [#allocation4], %s434
        %p436 = scmp.lt.s32.totalorder %s24, 1
        %s437 = scalar_select %p436, %s24, 1
        %s438 = smul.addr %s437, 37
        %s439 = smul.addr %s438, 8
        %s440 = scalar_lea.vmem %s0, %s439
        %s441 = smul.u32 16, %s25
        %p442 = scmp.eq.s32.totalorder %s25, 0
        // Predicated region
        $region83: #{tpu_custom_call.1} parent=77 // pred_check
          %p443 = pneg %p442
        $region84: #{tpu_custom_call.1} parent=77 // pred_check_branch
          %445 = sbr.rel (%p443) target = $region86
        $region85: #{tpu_custom_call.1} parent=77 // pred_region
          %446 = vst [vmem:[#allocation2] sm:$0x1] 0.0
        $region86: #{tpu_custom_call.1} parent=77 // pred_fallthru
          _
        %s447 = smul.u32 %s25, 128
        %v448 = vld [vmem:[%s405] sm:$0xff]
        %v449 = vld [vmem:[%s405 + $0x8] sm:$0xff]
        %v450 = vld [vmem:[%s405 + $0x10] sm:$0xff]
        %v451 = vld [vmem:[%s405 + $0x18] sm:$0xff]
        %v452 = vld [vmem:[%s405 + $0x20] sm:$0xff]
        %v453 = vld [vmem:[%s405 + $0x28] sm:$0xff]
        %v454 = vld [vmem:[%s405 + $0x30] sm:$0xff]
        %v455 = vld [vmem:[%s405 + $0x38] sm:$0xff]
        %v456 = vld [vmem:[%s405 + $0x40] sm:$0xff]
        %v457 = vld [vmem:[%s405 + $0x48] sm:$0xff]
        %v458 = vld [vmem:[%s405 + $0x50] sm:$0xff]
        %v459 = vld [vmem:[%s405 + $0x58] sm:$0xff]
        %v460 = vld [vmem:[%s405 + $0x60] sm:$0xff]
        %v461 = vld [vmem:[%s405 + $0x68] sm:$0xff]
        %v462 = vld [vmem:[%s405 + $0x70] sm:$0xff]
        %v463 = vld [vmem:[%s405 + $0x78] sm:$0xff]
        %s464 = scalar_lea.vmem %s405, 128 [#allocation3]
        %v465 = vld [vmem:[%s464] sm:$0xff]
        %v466 = vld [vmem:[%s464 + $0x8] sm:$0xff]
        %v467 = vld [vmem:[%s464 + $0x10] sm:$0xff]
        %v468 = vld [vmem:[%s464 + $0x18] sm:$0xff]
        %v469 = vld [vmem:[%s464 + $0x20] sm:$0xff]
        %v470 = vld [vmem:[%s464 + $0x28] sm:$0xff]
        %v471 = vld [vmem:[%s464 + $0x30] sm:$0xff]
        %v472 = vld [vmem:[%s464 + $0x38] sm:$0xff]
        %v473 = vld [vmem:[%s464 + $0x40] sm:$0xff]
        %v474 = vld [vmem:[%s464 + $0x48] sm:$0xff]
        %v475 = vld [vmem:[%s464 + $0x50] sm:$0xff]
        %v476 = vld [vmem:[%s464 + $0x58] sm:$0xff]
        %v477 = vld [vmem:[%s464 + $0x60] sm:$0xff]
        %v478 = vld [vmem:[%s464 + $0x68] sm:$0xff]
        %v479 = vld [vmem:[%s464 + $0x70] sm:$0xff]
        %v480 = vld [vmem:[%s464 + $0x78] sm:$0xff]
        %s481 = scalar_lea.vmem %s440, %s447
        %v482 = vld [vmem:[%s481] sm:$0xff]
        %v483 = vld [vmem:[%s481 + $0x8] sm:$0xff]
        %v484 = vld [vmem:[%s481 + $0x10] sm:$0xff]
        %v485 = vld [vmem:[%s481 + $0x18] sm:$0xff]
        %v486 = vld [vmem:[%s481 + $0x20] sm:$0xff]
        %v487 = vld [vmem:[%s481 + $0x28] sm:$0xff]
        %v488 = vld [vmem:[%s481 + $0x30] sm:$0xff]
        %v489 = vld [vmem:[%s481 + $0x38] sm:$0xff]
        %v490 = vld [vmem:[%s481 + $0x40] sm:$0xff]
        %v491 = vld [vmem:[%s481 + $0x48] sm:$0xff]
        %v492 = vld [vmem:[%s481 + $0x50] sm:$0xff]
        %v493 = vld [vmem:[%s481 + $0x58] sm:$0xff]
        %v494 = vld [vmem:[%s481 + $0x60] sm:$0xff]
        %v495 = vld [vmem:[%s481 + $0x68] sm:$0xff]
        %v496 = vld [vmem:[%s481 + $0x70] sm:$0xff]
        %v497 = vld [vmem:[%s481 + $0x78] sm:$0xff]
        %v498 = vmul.f32 %v482, %v448
        %v499 = vmul.f32 %v483, %v449
        %v500 = vmul.f32 %v484, %v450
        %v501 = vmul.f32 %v485, %v451
        %v502 = vmul.f32 %v486, %v452
        %v503 = vmul.f32 %v487, %v453
        %v504 = vmul.f32 %v488, %v454
        %v505 = vmul.f32 %v489, %v455
        %v506 = vmul.f32 %v490, %v456
        %v507 = vmul.f32 %v491, %v457
        %v508 = vmul.f32 %v492, %v458
        %v509 = vmul.f32 %v493, %v459
        %v510 = vmul.f32 %v494, %v460
        %v511 = vmul.f32 %v495, %v461
        %v512 = vmul.f32 %v496, %v462
        %v513 = vmul.f32 %v497, %v463
        %v514 = vld [vmem:[%s2] sm:$0xf]
        %s515 = sadd.s32 %s447, 1
        %s516 = scalar_lea.vmem %s440, %s515
        %v517 = vld [vmem:[%s516] sm:$0xff]
        %v518 = vld [vmem:[%s516 + $0x8] sm:$0xff]
        %v519 = vld [vmem:[%s516 + $0x10] sm:$0xff]
        %v520 = vld [vmem:[%s516 + $0x18] sm:$0xff]
        %v521 = vld [vmem:[%s516 + $0x20] sm:$0xff]
        %v522 = vld [vmem:[%s516 + $0x28] sm:$0xff]
        %v523 = vld [vmem:[%s516 + $0x30] sm:$0xff]
        %v524 = vld [vmem:[%s516 + $0x38] sm:$0xff]
        %v525 = vld [vmem:[%s516 + $0x40] sm:$0xff]
        %v526 = vld [vmem:[%s516 + $0x48] sm:$0xff]
        %v527 = vld [vmem:[%s516 + $0x50] sm:$0xff]
        %v528 = vld [vmem:[%s516 + $0x58] sm:$0xff]
        %v529 = vld [vmem:[%s516 + $0x60] sm:$0xff]
        %v530 = vld [vmem:[%s516 + $0x68] sm:$0xff]
        %v531 = vld [vmem:[%s516 + $0x70] sm:$0xff]
        %v532 = vld [vmem:[%s516 + $0x78] sm:$0xff]
        %s533 = scalar_lea.vmem %s2, 4
        %v534 = vld [vmem:[%s533] sm:$0xf]
        %vm535 = vcmask 31744
        %v537 = vsel %vm535, %v517, 0
        %v540 = vsel %vm535, %v518, 0
        %v543 = vsel %vm535, %v519, 0
        %v546 = vsel %vm535, %v520, 0
        %v549 = vsel %vm535, %v521, 0
        %v552 = vsel %vm535, %v522, 0
        %v555 = vsel %vm535, %v523, 0
        %v558 = vsel %vm535, %v524, 0
        %v561 = vsel %vm535, %v525, 0
        %v564 = vsel %vm535, %v526, 0
        %v567 = vsel %vm535, %v527, 0
        %v570 = vsel %vm535, %v528, 0
        %v573 = vsel %vm535, %v529, 0
        %v576 = vsel %vm535, %v530, 0
        %v579 = vsel %vm535, %v531, 0
        %v582 = vsel %vm535, %v532, 0
        %vm584 = vcmask 1043456
        %v586 = vsel %vm584, %v534, 0
        %588 = vmatprep.subr.mxu0 0.0
        %589 = vmatpush1.msra.mxu0 0.0
        %590 = vmatprep.subr.mxu0 0.0
        %591 = vmatpush1.msra.mxu0 0.0
        %592 = vmatprep.subr.mxu0 0.0
        %593 = vmatpush1.msra.mxu0 0.0
        %594 = vmatprep.subr.mxu0 0.0
        %595 = vmatpush1.msra.mxu0 0.0
        %596 = vmatprep.subr.mxu0 0.0
        %597 = vmatpush1.msra.mxu0 0.0
        %598 = vmatprep.subr.mxu0 0.0
        %599 = vmatpush1.msra.mxu0 0.0
        %600 = vmatprep.subr.mxu0 0.0
        %601 = vmatpush1.msra.mxu0 0.0
        %602 = vmatprep.subr.mxu0 0.0
        %603 = vmatpush1.msra.mxu0 0.0
        %604 = vmatprep.subr.mxu0 0.0
        %605 = vmatpush1.msra.mxu0 0.0
        %606 = vmatprep.subr.mxu0 0.0
        %607 = vmatpush1.msra.mxu0 0.0
        %608 = vmatprep.subr.mxu0 0.0
        %609 = vmatpush1.msra.mxu0 0.0
        %610 = vmatprep.subr.mxu0 0.0
        %611 = vmatpush1.msra.mxu0 0.0
        %612 = vmatprep.subr.mxu0 0.0
        %613 = vmatpush1.msra.mxu0 0.0
        %614 = vmatprep.subr.mxu0 0.0
        %615 = vmatpush1.msra.mxu0 0.0
        %616 = vmatprep.subr.mxu0 0.0
        %617 = vmatpush1.msra.mxu0 0.0
        %618 = vmatprep.subr.mxu0 0.0
        %619 = vmatpush1.msra.mxu0 %v586
        %620 = vmatprep.subr.mxu0 0.0
        %621 = vmatpush2.msra.mxu0 0.0
        %622 = vmatprep.subr.mxu0 0.0
        %623 = vmatpush2.msra.mxu0 0.0
        %624 = vmatprep.subr.mxu0 0.0
        %625 = vmatpush2.msra.mxu0 0.0
        %626 = vmatprep.subr.mxu0 0.0
        %627 = vmatpush2.msra.mxu0 0.0
        %628 = vmatprep.subr.mxu0 0.0
        %629 = vmatpush2.msra.mxu0 0.0
        %630 = vmatprep.subr.mxu0 0.0
        %631 = vmatpush2.msra.mxu0 0.0
        %632 = vmatprep.subr.mxu0 0.0
        %633 = vmatpush2.msra.mxu0 0.0
        %634 = vmatprep.subr.mxu0 0.0
        %635 = vmatpush2.msra.mxu0 0.0
        %636 = vmatprep.subr.mxu0 0.0
        %637 = vmatpush2.msra.mxu0 0.0
        %638 = vmatprep.subr.mxu0 0.0
        %639 = vmatpush2.msra.mxu0 0.0
        %640 = vmatprep.subr.mxu0 0.0
        %641 = vmatpush2.msra.mxu0 0.0
        %642 = vmatprep.subr.mxu0 0.0
        %643 = vmatpush2.msra.mxu0 0.0
        %644 = vmatprep.subr.mxu0 0.0
        %645 = vmatpush2.msra.mxu0 0.0
        %646 = vmatprep.subr.mxu0 0.0
        %647 = vmatpush2.msra.mxu0 0.0
        %648 = vmatprep.subr.mxu0 0.0
        %649 = vmatpush2.msra.mxu0 0.0
        %650 = vmatprep.subr.mxu0 0.0
        %651 = vmatpush2.msra.mxu0 0.0
        %652 = vmatprep.mubr.f32.mxu0 0.0
        %653 = vmatmul.mubr.f32.gmra.mxu0 %v537
        %v654 = vpop.f32.mrf.mxu0
        %v655 = vadd.f32 0.0, %v654
        %v656 = vpop.f32.mrf.mxu0
        %657 = vmatprep.mubr.f32.mxu0 0.0
        %658 = vmatmul.mubr.f32.gmra.mxu0 %v540
        %v659 = vpop.f32.mrf.mxu0
        %v660 = vadd.f32 0.0, %v659
        %v661 = vpop.f32.mrf.mxu0
        %662 = vmatprep.mubr.f32.mxu0 0.0
        %663 = vmatmul.mubr.f32.gmra.mxu0 %v543
        %v664 = vpop.f32.mrf.mxu0
        %v665 = vadd.f32 0.0, %v664
        %v666 = vpop.f32.mrf.mxu0
        %667 = vmatprep.mubr.f32.mxu0 0.0
        %668 = vmatmul.mubr.f32.gmra.mxu0 %v546
        %v669 = vpop.f32.mrf.mxu0
        %v670 = vadd.f32 0.0, %v669
        %v671 = vpop.f32.mrf.mxu0
        %672 = vmatprep.mubr.f32.mxu0 0.0
        %673 = vmatmul.mubr.f32.gmra.mxu0 %v549
        %v674 = vpop.f32.mrf.mxu0
        %v675 = vadd.f32 0.0, %v674
        %v676 = vpop.f32.mrf.mxu0
        %677 = vmatprep.mubr.f32.mxu0 0.0
        %678 = vmatmul.mubr.f32.gmra.mxu0 %v552
        %v679 = vpop.f32.mrf.mxu0
        %v680 = vadd.f32 0.0, %v679
        %v681 = vpop.f32.mrf.mxu0
        %682 = vmatprep.mubr.f32.mxu0 0.0
        %683 = vmatmul.mubr.f32.gmra.mxu0 %v555
        %v684 = vpop.f32.mrf.mxu0
        %v685 = vadd.f32 0.0, %v684
        %v686 = vpop.f32.mrf.mxu0
        %687 = vmatprep.mubr.f32.mxu0 0.0
        %688 = vmatmul.mubr.f32.gmra.mxu0 %v558
        %v689 = vpop.f32.mrf.mxu0
        %v690 = vadd.f32 0.0, %v689
        %v691 = vpop.f32.mrf.mxu0
        %692 = vmatprep.mubr.f32.mxu0 0.0
        %693 = vmatmul.mubr.f32.gmra.mxu0 %v561
        %v694 = vpop.f32.mrf.mxu0
        %v695 = vadd.f32 0.0, %v694
        %v696 = vpop.f32.mrf.mxu0
        %697 = vmatprep.mubr.f32.mxu0 0.0
        %698 = vmatmul.mubr.f32.gmra.mxu0 %v564
        %v699 = vpop.f32.mrf.mxu0
        %v700 = vadd.f32 0.0, %v699
        %v701 = vpop.f32.mrf.mxu0
        %702 = vmatprep.mubr.f32.mxu0 0.0
        %703 = vmatmul.mubr.f32.gmra.mxu0 %v567
        %v704 = vpop.f32.mrf.mxu0
        %v705 = vadd.f32 0.0, %v704
        %v706 = vpop.f32.mrf.mxu0
        %707 = vmatprep.mubr.f32.mxu0 0.0
        %708 = vmatmul.mubr.f32.gmra.mxu0 %v570
        %v709 = vpop.f32.mrf.mxu0
        %v710 = vadd.f32 0.0, %v709
        %v711 = vpop.f32.mrf.mxu0
        %712 = vmatprep.mubr.f32.mxu0 0.0
        %713 = vmatmul.mubr.f32.gmra.mxu0 %v573
        %v714 = vpop.f32.mrf.mxu0
        %v715 = vadd.f32 0.0, %v714
        %v716 = vpop.f32.mrf.mxu0
        %717 = vmatprep.mubr.f32.mxu0 0.0
        %718 = vmatmul.mubr.f32.gmra.mxu0 %v576
        %v719 = vpop.f32.mrf.mxu0
        %v720 = vadd.f32 0.0, %v719
        %v721 = vpop.f32.mrf.mxu0
        %722 = vmatprep.mubr.f32.mxu0 0.0
        %723 = vmatmul.mubr.f32.gmra.mxu0 %v579
        %v724 = vpop.f32.mrf.mxu0
        %v725 = vadd.f32 0.0, %v724
        %v726 = vpop.f32.mrf.mxu0
        %727 = vmatprep.mubr.f32.mxu0 0.0
        %728 = vmatmul.mubr.f32.gmra.mxu0 %v582
        %v729 = vpop.f32.mrf.mxu0
        %v730 = vadd.f32 0.0, %v729
        %v731 = vpop.f32.mrf.mxu0
        %732 = vdwg.mxu0
        %v734 = vsel %vm535, %v498, 0
        %v737 = vsel %vm535, %v499, 0
        %v740 = vsel %vm535, %v500, 0
        %v743 = vsel %vm535, %v501, 0
        %v746 = vsel %vm535, %v502, 0
        %v749 = vsel %vm535, %v503, 0
        %v752 = vsel %vm535, %v504, 0
        %v755 = vsel %vm535, %v505, 0
        %v758 = vsel %vm535, %v506, 0
        %v761 = vsel %vm535, %v507, 0
        %v764 = vsel %vm535, %v508, 0
        %v767 = vsel %vm535, %v509, 0
        %v770 = vsel %vm535, %v510, 0
        %v773 = vsel %vm535, %v511, 0
        %v776 = vsel %vm535, %v512, 0
        %v779 = vsel %vm535, %v513, 0
        %v782 = vsel %vm584, %v514, 0
        %784 = vmatprep.subr.mxu0 0.0
        %785 = vmatpush1.msra.mxu0 0.0
        %786 = vmatprep.subr.mxu0 0.0
        %787 = vmatpush1.msra.mxu0 0.0
        %788 = vmatprep.subr.mxu0 0.0
        %789 = vmatpush1.msra.mxu0 0.0
        %790 = vmatprep.subr.mxu0 0.0
        %791 = vmatpush1.msra.mxu0 0.0
        %792 = vmatprep.subr.mxu0 0.0
        %793 = vmatpush1.msra.mxu0 0.0
        %794 = vmatprep.subr.mxu0 0.0
        %795 = vmatpush1.msra.mxu0 0.0
        %796 = vmatprep.subr.mxu0 0.0
        %797 = vmatpush1.msra.mxu0 0.0
        %798 = vmatprep.subr.mxu0 0.0
        %799 = vmatpush1.msra.mxu0 0.0
        %800 = vmatprep.subr.mxu0 0.0
        %801 = vmatpush1.msra.mxu0 0.0
        %802 = vmatprep.subr.mxu0 0.0
        %803 = vmatpush1.msra.mxu0 0.0
        %804 = vmatprep.subr.mxu0 0.0
        %805 = vmatpush1.msra.mxu0 0.0
        %806 = vmatprep.subr.mxu0 0.0
        %807 = vmatpush1.msra.mxu0 0.0
        %808 = vmatprep.subr.mxu0 0.0
        %809 = vmatpush1.msra.mxu0 0.0
        %810 = vmatprep.subr.mxu0 0.0
        %811 = vmatpush1.msra.mxu0 0.0
        %812 = vmatprep.subr.mxu0 0.0
        %813 = vmatpush1.msra.mxu0 0.0
        %814 = vmatprep.subr.mxu0 0.0
        %815 = vmatpush1.msra.mxu0 %v782
        %816 = vmatprep.subr.mxu0 0.0
        %817 = vmatpush2.msra.mxu0 0.0
        %818 = vmatprep.subr.mxu0 0.0
        %819 = vmatpush2.msra.mxu0 0.0
        %820 = vmatprep.subr.mxu0 0.0
        %821 = vmatpush2.msra.mxu0 0.0
        %822 = vmatprep.subr.mxu0 0.0
        %823 = vmatpush2.msra.mxu0 0.0
        %824 = vmatprep.subr.mxu0 0.0
        %825 = vmatpush2.msra.mxu0 0.0
        %826 = vmatprep.subr.mxu0 0.0
        %827 = vmatpush2.msra.mxu0 0.0
        %828 = vmatprep.subr.mxu0 0.0
        %829 = vmatpush2.msra.mxu0 0.0
        %830 = vmatprep.subr.mxu0 0.0
        %831 = vmatpush2.msra.mxu0 0.0
        %832 = vmatprep.subr.mxu0 0.0
        %833 = vmatpush2.msra.mxu0 0.0
        %834 = vmatprep.subr.mxu0 0.0
        %835 = vmatpush2.msra.mxu0 0.0
        %836 = vmatprep.subr.mxu0 0.0
        %837 = vmatpush2.msra.mxu0 0.0
        %838 = vmatprep.subr.mxu0 0.0
        %839 = vmatpush2.msra.mxu0 0.0
        %840 = vmatprep.subr.mxu0 0.0
        %841 = vmatpush2.msra.mxu0 0.0
        %842 = vmatprep.subr.mxu0 0.0
        %843 = vmatpush2.msra.mxu0 0.0
        %844 = vmatprep.subr.mxu0 0.0
        %845 = vmatpush2.msra.mxu0 0.0
        %846 = vmatprep.subr.mxu0 0.0
        %847 = vmatpush2.msra.mxu0 0.0
        %848 = vmatprep.mubr.f32.mxu0 0.0
        %849 = vmatmul.mubr.f32.gmra.mxu0 %v734
        %v850 = vpop.f32.mrf.mxu0
        %v851 = vadd.f32 %v655, %v850
        %v852 = vpop.f32.mrf.mxu0
        %853 = vmatprep.mubr.f32.mxu0 0.0
        %854 = vmatmul.mubr.f32.gmra.mxu0 %v737
        %v855 = vpop.f32.mrf.mxu0
        %v856 = vadd.f32 %v660, %v855
        %v857 = vpop.f32.mrf.mxu0
        %858 = vmatprep.mubr.f32.mxu0 0.0
        %859 = vmatmul.mubr.f32.gmra.mxu0 %v740
        %v860 = vpop.f32.mrf.mxu0
        %v861 = vadd.f32 %v665, %v860
        %v862 = vpop.f32.mrf.mxu0
        %863 = vmatprep.mubr.f32.mxu0 0.0
        %864 = vmatmul.mubr.f32.gmra.mxu0 %v743
        %v865 = vpop.f32.mrf.mxu0
        %v866 = vadd.f32 %v670, %v865
        %v867 = vpop.f32.mrf.mxu0
        %868 = vmatprep.mubr.f32.mxu0 0.0
        %869 = vmatmul.mubr.f32.gmra.mxu0 %v746
        %v870 = vpop.f32.mrf.mxu0
        %v871 = vadd.f32 %v675, %v870
        %v872 = vpop.f32.mrf.mxu0
        %873 = vmatprep.mubr.f32.mxu0 0.0
        %874 = vmatmul.mubr.f32.gmra.mxu0 %v749
        %v875 = vpop.f32.mrf.mxu0
        %v876 = vadd.f32 %v680, %v875
        %v877 = vpop.f32.mrf.mxu0
        %878 = vmatprep.mubr.f32.mxu0 0.0
        %879 = vmatmul.mubr.f32.gmra.mxu0 %v752
        %v880 = vpop.f32.mrf.mxu0
        %v881 = vadd.f32 %v685, %v880
        %v882 = vpop.f32.mrf.mxu0
        %883 = vmatprep.mubr.f32.mxu0 0.0
        %884 = vmatmul.mubr.f32.gmra.mxu0 %v755
        %v885 = vpop.f32.mrf.mxu0
        %v886 = vadd.f32 %v690, %v885
        %v887 = vpop.f32.mrf.mxu0
        %888 = vmatprep.mubr.f32.mxu0 0.0
        %889 = vmatmul.mubr.f32.gmra.mxu0 %v758
        %v890 = vpop.f32.mrf.mxu0
        %v891 = vadd.f32 %v695, %v890
        %v892 = vpop.f32.mrf.mxu0
        %893 = vmatprep.mubr.f32.mxu0 0.0
        %894 = vmatmul.mubr.f32.gmra.mxu0 %v761
        %v895 = vpop.f32.mrf.mxu0
        %v896 = vadd.f32 %v700, %v895
        %v897 = vpop.f32.mrf.mxu0
        %898 = vmatprep.mubr.f32.mxu0 0.0
        %899 = vmatmul.mubr.f32.gmra.mxu0 %v764
        %v900 = vpop.f32.mrf.mxu0
        %v901 = vadd.f32 %v705, %v900
        %v902 = vpop.f32.mrf.mxu0
        %903 = vmatprep.mubr.f32.mxu0 0.0
        %904 = vmatmul.mubr.f32.gmra.mxu0 %v767
        %v905 = vpop.f32.mrf.mxu0
        %v906 = vadd.f32 %v710, %v905
        %v907 = vpop.f32.mrf.mxu0
        %908 = vmatprep.mubr.f32.mxu0 0.0
        %909 = vmatmul.mubr.f32.gmra.mxu0 %v770
        %v910 = vpop.f32.mrf.mxu0
        %v911 = vadd.f32 %v715, %v910
        %v912 = vpop.f32.mrf.mxu0
        %913 = vmatprep.mubr.f32.mxu0 0.0
        %914 = vmatmul.mubr.f32.gmra.mxu0 %v773
        %v915 = vpop.f32.mrf.mxu0
        %v916 = vadd.f32 %v720, %v915
        %v917 = vpop.f32.mrf.mxu0
        %918 = vmatprep.mubr.f32.mxu0 0.0
        %919 = vmatmul.mubr.f32.gmra.mxu0 %v776
        %v920 = vpop.f32.mrf.mxu0
        %v921 = vadd.f32 %v725, %v920
        %v922 = vpop.f32.mrf.mxu0
        %923 = vmatprep.mubr.f32.mxu0 0.0
        %924 = vmatmul.mubr.f32.gmra.mxu0 %v779
        %v925 = vpop.f32.mrf.mxu0
        %v926 = vadd.f32 %v730, %v925
        %v927 = vpop.f32.mrf.mxu0
        %928 = vdwg.mxu0
        %s929 = sadd.s32 %s447, 2
        %s930 = scalar_lea.vmem %s440, %s929
        %v931 = vld [vmem:[%s930] sm:$0xff]
        %v932 = vld [vmem:[%s930 + $0x8] sm:$0xff]
        %v933 = vld [vmem:[%s930 + $0x10] sm:$0xff]
        %v934 = vld [vmem:[%s930 + $0x18] sm:$0xff]
        %v935 = vld [vmem:[%s930 + $0x20] sm:$0xff]
        %v936 = vld [vmem:[%s930 + $0x28] sm:$0xff]
        %v937 = vld [vmem:[%s930 + $0x30] sm:$0xff]
        %v938 = vld [vmem:[%s930 + $0x38] sm:$0xff]
        %v939 = vld [vmem:[%s930 + $0x40] sm:$0xff]
        %v940 = vld [vmem:[%s930 + $0x48] sm:$0xff]
        %v941 = vld [vmem:[%s930 + $0x50] sm:$0xff]
        %v942 = vld [vmem:[%s930 + $0x58] sm:$0xff]
        %v943 = vld [vmem:[%s930 + $0x60] sm:$0xff]
        %v944 = vld [vmem:[%s930 + $0x68] sm:$0xff]
        %v945 = vld [vmem:[%s930 + $0x70] sm:$0xff]
        %v946 = vld [vmem:[%s930 + $0x78] sm:$0xff]
        %v947 = vmul.f32 %v931, %v465
        %v948 = vmul.f32 %v932, %v466
        %v949 = vmul.f32 %v933, %v467
        %v950 = vmul.f32 %v934, %v468
        %v951 = vmul.f32 %v935, %v469
        %v952 = vmul.f32 %v936, %v470
        %v953 = vmul.f32 %v937, %v471
        %v954 = vmul.f32 %v938, %v472
        %v955 = vmul.f32 %v939, %v473
        %v956 = vmul.f32 %v940, %v474
        %v957 = vmul.f32 %v941, %v475
        %v958 = vmul.f32 %v942, %v476
        %v959 = vmul.f32 %v943, %v477
        %v960 = vmul.f32 %v944, %v478
        %v961 = vmul.f32 %v945, %v479
        %v962 = vmul.f32 %v946, %v480
        %s963 = scalar_lea.vmem %s2, 8
        %v964 = vld [vmem:[%s963] sm:$0xf]
        %v966 = vsel %vm535, %v947, 0
        %v969 = vsel %vm535, %v948, 0
        %v972 = vsel %vm535, %v949, 0
        %v975 = vsel %vm535, %v950, 0
        %v978 = vsel %vm535, %v951, 0
        %v981 = vsel %vm535, %v952, 0
        %v984 = vsel %vm535, %v953, 0
        %v987 = vsel %vm535, %v954, 0
        %v990 = vsel %vm535, %v955, 0
        %v993 = vsel %vm535, %v956, 0
        %v996 = vsel %vm535, %v957, 0
        %v999 = vsel %vm535, %v958, 0
        %v1002 = vsel %vm535, %v959, 0
        %v1005 = vsel %vm535, %v960, 0
        %v1008 = vsel %vm535, %v961, 0
        %v1011 = vsel %vm535, %v962, 0
        %v1014 = vsel %vm584, %v964, 0
        %1016 = vmatprep.subr.mxu0 0.0
        %1017 = vmatpush1.msra.mxu0 0.0
        %1018 = vmatprep.subr.mxu0 0.0
        %1019 = vmatpush1.msra.mxu0 0.0
        %1020 = vmatprep.subr.mxu0 0.0
        %1021 = vmatpush1.msra.mxu0 0.0
        %1022 = vmatprep.subr.mxu0 0.0
        %1023 = vmatpush1.msra.mxu0 0.0
        %1024 = vmatprep.subr.mxu0 0.0
        %1025 = vmatpush1.msra.mxu0 0.0
        %1026 = vmatprep.subr.mxu0 0.0
        %1027 = vmatpush1.msra.mxu0 0.0
        %1028 = vmatprep.subr.mxu0 0.0
        %1029 = vmatpush1.msra.mxu0 0.0
        %1030 = vmatprep.subr.mxu0 0.0
        %1031 = vmatpush1.msra.mxu0 0.0
        %1032 = vmatprep.subr.mxu0 0.0
        %1033 = vmatpush1.msra.mxu0 0.0
        %1034 = vmatprep.subr.mxu0 0.0
        %1035 = vmatpush1.msra.mxu0 0.0
        %1036 = vmatprep.subr.mxu0 0.0
        %1037 = vmatpush1.msra.mxu0 0.0
        %1038 = vmatprep.subr.mxu0 0.0
        %1039 = vmatpush1.msra.mxu0 0.0
        %1040 = vmatprep.subr.mxu0 0.0
        %1041 = vmatpush1.msra.mxu0 0.0
        %1042 = vmatprep.subr.mxu0 0.0
        %1043 = vmatpush1.msra.mxu0 0.0
        %1044 = vmatprep.subr.mxu0 0.0
        %1045 = vmatpush1.msra.mxu0 0.0
        %1046 = vmatprep.subr.mxu0 0.0
        %1047 = vmatpush1.msra.mxu0 %v1014
        %1048 = vmatprep.subr.mxu0 0.0
        %1049 = vmatpush2.msra.mxu0 0.0
        %1050 = vmatprep.subr.mxu0 0.0
        %1051 = vmatpush2.msra.mxu0 0.0
        %1052 = vmatprep.subr.mxu0 0.0
        %1053 = vmatpush2.msra.mxu0 0.0
        %1054 = vmatprep.subr.mxu0 0.0
        %1055 = vmatpush2.msra.mxu0 0.0
        %1056 = vmatprep.subr.mxu0 0.0
        %1057 = vmatpush2.msra.mxu0 0.0
        %1058 = vmatprep.subr.mxu0 0.0
        %1059 = vmatpush2.msra.mxu0 0.0
        %1060 = vmatprep.subr.mxu0 0.0
        %1061 = vmatpush2.msra.mxu0 0.0
        %1062 = vmatprep.subr.mxu0 0.0
        %1063 = vmatpush2.msra.mxu0 0.0
        %1064 = vmatprep.subr.mxu0 0.0
        %1065 = vmatpush2.msra.mxu0 0.0
        %1066 = vmatprep.subr.mxu0 0.0
        %1067 = vmatpush2.msra.mxu0 0.0
        %1068 = vmatprep.subr.mxu0 0.0
        %1069 = vmatpush2.msra.mxu0 0.0
        %1070 = vmatprep.subr.mxu0 0.0
        %1071 = vmatpush2.msra.mxu0 0.0
        %1072 = vmatprep.subr.mxu0 0.0
        %1073 = vmatpush2.msra.mxu0 0.0
        %1074 = vmatprep.subr.mxu0 0.0
        %1075 = vmatpush2.msra.mxu0 0.0
        %1076 = vmatprep.subr.mxu0 0.0
        %1077 = vmatpush2.msra.mxu0 0.0
        %1078 = vmatprep.subr.mxu0 0.0
        %1079 = vmatpush2.msra.mxu0 0.0
        %1080 = vmatprep.mubr.f32.mxu0 0.0
        %1081 = vmatmul.mubr.f32.gmra.mxu0 %v966
        %v1082 = vpop.f32.mrf.mxu0
        %v1083 = vadd.f32 0.0, %v1082
        %v1084 = vpop.f32.mrf.mxu0
        %1085 = vmatprep.mubr.f32.mxu0 0.0
        %1086 = vmatmul.mubr.f32.gmra.mxu0 %v969
        %v1087 = vpop.f32.mrf.mxu0
        %v1088 = vadd.f32 0.0, %v1087
        %v1089 = vpop.f32.mrf.mxu0
        %1090 = vmatprep.mubr.f32.mxu0 0.0
        %1091 = vmatmul.mubr.f32.gmra.mxu0 %v972
        %v1092 = vpop.f32.mrf.mxu0
        %v1093 = vadd.f32 0.0, %v1092
        %v1094 = vpop.f32.mrf.mxu0
        %1095 = vmatprep.mubr.f32.mxu0 0.0
        %1096 = vmatmul.mubr.f32.gmra.mxu0 %v975
        %v1097 = vpop.f32.mrf.mxu0
        %v1098 = vadd.f32 0.0, %v1097
        %v1099 = vpop.f32.mrf.mxu0
        %1100 = vmatprep.mubr.f32.mxu0 0.0
        %1101 = vmatmul.mubr.f32.gmra.mxu0 %v978
        %v1102 = vpop.f32.mrf.mxu0
        %v1103 = vadd.f32 0.0, %v1102
        %v1104 = vpop.f32.mrf.mxu0
        %1105 = vmatprep.mubr.f32.mxu0 0.0
        %1106 = vmatmul.mubr.f32.gmra.mxu0 %v981
        %v1107 = vpop.f32.mrf.mxu0
        %v1108 = vadd.f32 0.0, %v1107
        %v1109 = vpop.f32.mrf.mxu0
        %1110 = vmatprep.mubr.f32.mxu0 0.0
        %1111 = vmatmul.mubr.f32.gmra.mxu0 %v984
        %v1112 = vpop.f32.mrf.mxu0
        %v1113 = vadd.f32 0.0, %v1112
        %v1114 = vpop.f32.mrf.mxu0
        %1115 = vmatprep.mubr.f32.mxu0 0.0
        %1116 = vmatmul.mubr.f32.gmra.mxu0 %v987
        %v1117 = vpop.f32.mrf.mxu0
        %v1118 = vadd.f32 0.0, %v1117
        %v1119 = vpop.f32.mrf.mxu0
        %1120 = vmatprep.mubr.f32.mxu0 0.0
        %1121 = vmatmul.mubr.f32.gmra.mxu0 %v990
        %v1122 = vpop.f32.mrf.mxu0
        %v1123 = vadd.f32 0.0, %v1122
        %v1124 = vpop.f32.mrf.mxu0
        %1125 = vmatprep.mubr.f32.mxu0 0.0
        %1126 = vmatmul.mubr.f32.gmra.mxu0 %v993
        %v1127 = vpop.f32.mrf.mxu0
        %v1128 = vadd.f32 0.0, %v1127
        %v1129 = vpop.f32.mrf.mxu0
        %1130 = vmatprep.mubr.f32.mxu0 0.0
        %1131 = vmatmul.mubr.f32.gmra.mxu0 %v996
        %v1132 = vpop.f32.mrf.mxu0
        %v1133 = vadd.f32 0.0, %v1132
        %v1134 = vpop.f32.mrf.mxu0
        %1135 = vmatprep.mubr.f32.mxu0 0.0
        %1136 = vmatmul.mubr.f32.gmra.mxu0 %v999
        %v1137 = vpop.f32.mrf.mxu0
        %v1138 = vadd.f32 0.0, %v1137
        %v1139 = vpop.f32.mrf.mxu0
        %1140 = vmatprep.mubr.f32.mxu0 0.0
        %1141 = vmatmul.mubr.f32.gmra.mxu0 %v1002
        %v1142 = vpop.f32.mrf.mxu0
        %v1143 = vadd.f32 0.0, %v1142
        %v1144 = vpop.f32.mrf.mxu0
        %1145 = vmatprep.mubr.f32.mxu0 0.0
        %1146 = vmatmul.mubr.f32.gmra.mxu0 %v1005
        %v1147 = vpop.f32.mrf.mxu0
        %v1148 = vadd.f32 0.0, %v1147
        %v1149 = vpop.f32.mrf.mxu0
        %1150 = vmatprep.mubr.f32.mxu0 0.0
        %1151 = vmatmul.mubr.f32.gmra.mxu0 %v1008
        %v1152 = vpop.f32.mrf.mxu0
        %v1153 = vadd.f32 0.0, %v1152
        %v1154 = vpop.f32.mrf.mxu0
        %1155 = vmatprep.mubr.f32.mxu0 0.0
        %1156 = vmatmul.mubr.f32.gmra.mxu0 %v1011
        %v1157 = vpop.f32.mrf.mxu0
        %v1158 = vadd.f32 0.0, %v1157
        %v1159 = vpop.f32.mrf.mxu0
        %1160 = vdwg.mxu0
        %v1161 = vadd.f32 %v851, %v1083
        %v1162 = vadd.f32 %v856, %v1088
        %v1163 = vadd.f32 %v861, %v1093
        %v1164 = vadd.f32 %v866, %v1098
        %v1165 = vadd.f32 %v871, %v1103
        %v1166 = vadd.f32 %v876, %v1108
        %v1167 = vadd.f32 %v881, %v1113
        %v1168 = vadd.f32 %v886, %v1118
        %v1169 = vadd.f32 %v891, %v1123
        %v1170 = vadd.f32 %v896, %v1128
        %v1171 = vadd.f32 %v901, %v1133
        %v1172 = vadd.f32 %v906, %v1138
        %v1173 = vadd.f32 %v911, %v1143
        %v1174 = vadd.f32 %v916, %v1148
        %v1175 = vadd.f32 %v921, %v1153
        %v1176 = vadd.f32 %v926, %v1158
        %s1177 = sadd.s32 %s447, 16
        %s1178 = scalar_lea.vmem %s440, %s1177
        %v1179 = vld [vmem:[%s1178] sm:$0xff]
        %v1180 = vld [vmem:[%s1178 + $0x8] sm:$0xff]
        %v1181 = vld [vmem:[%s1178 + $0x10] sm:$0xff]
        %v1182 = vld [vmem:[%s1178 + $0x18] sm:$0xff]
        %v1183 = vld [vmem:[%s1178 + $0x20] sm:$0xff]
        %v1184 = vld [vmem:[%s1178 + $0x28] sm:$0xff]
        %v1185 = vld [vmem:[%s1178 + $0x30] sm:$0xff]
        %v1186 = vld [vmem:[%s1178 + $0x38] sm:$0xff]
        %v1187 = vld [vmem:[%s1178 + $0x40] sm:$0xff]
        %v1188 = vld [vmem:[%s1178 + $0x48] sm:$0xff]
        %v1189 = vld [vmem:[%s1178 + $0x50] sm:$0xff]
        %v1190 = vld [vmem:[%s1178 + $0x58] sm:$0xff]
        %v1191 = vld [vmem:[%s1178 + $0x60] sm:$0xff]
        %v1192 = vld [vmem:[%s1178 + $0x68] sm:$0xff]
        %v1193 = vld [vmem:[%s1178 + $0x70] sm:$0xff]
        %v1194 = vld [vmem:[%s1178 + $0x78] sm:$0xff]
        %v1195 = vmul.f32 %v1179, %v448
        %v1196 = vmul.f32 %v1180, %v449
        %v1197 = vmul.f32 %v1181, %v450
        %v1198 = vmul.f32 %v1182, %v451
        %v1199 = vmul.f32 %v1183, %v452
        %v1200 = vmul.f32 %v1184, %v453
        %v1201 = vmul.f32 %v1185, %v454
        %v1202 = vmul.f32 %v1186, %v455
        %v1203 = vmul.f32 %v1187, %v456
        %v1204 = vmul.f32 %v1188, %v457
        %v1205 = vmul.f32 %v1189, %v458
        %v1206 = vmul.f32 %v1190, %v459
        %v1207 = vmul.f32 %v1191, %v460
        %v1208 = vmul.f32 %v1192, %v461
        %v1209 = vmul.f32 %v1193, %v462
        %v1210 = vmul.f32 %v1194, %v463
        %s1211 = scalar_lea.vmem %s2, 12
        %v1212 = vld [vmem:[%s1211] sm:$0xf]
        %v1214 = vsel %vm535, %v1195, 0
        %v1217 = vsel %vm535, %v1196, 0
        %v1220 = vsel %vm535, %v1197, 0
        %v1223 = vsel %vm535, %v1198, 0
        %v1226 = vsel %vm535, %v1199, 0
        %v1229 = vsel %vm535, %v1200, 0
        %v1232 = vsel %vm535, %v1201, 0
        %v1235 = vsel %vm535, %v1202, 0
        %v1238 = vsel %vm535, %v1203, 0
        %v1241 = vsel %vm535, %v1204, 0
        %v1244 = vsel %vm535, %v1205, 0
        %v1247 = vsel %vm535, %v1206, 0
        %v1250 = vsel %vm535, %v1207, 0
        %v1253 = vsel %vm535, %v1208, 0
        %v1256 = vsel %vm535, %v1209, 0
        %v1259 = vsel %vm535, %v1210, 0
        %v1262 = vsel %vm584, %v1212, 0
        %1264 = vmatprep.subr.mxu0 0.0
        %1265 = vmatpush1.msra.mxu0 0.0
        %1266 = vmatprep.subr.mxu0 0.0
        %1267 = vmatpush1.msra.mxu0 0.0
        %1268 = vmatprep.subr.mxu0 0.0
        %1269 = vmatpush1.msra.mxu0 0.0
        %1270 = vmatprep.subr.mxu0 0.0
        %1271 = vmatpush1.msra.mxu0 0.0
        %1272 = vmatprep.subr.mxu0 0.0
        %1273 = vmatpush1.msra.mxu0 0.0
        %1274 = vmatprep.subr.mxu0 0.0
        %1275 = vmatpush1.msra.mxu0 0.0
        %1276 = vmatprep.subr.mxu0 0.0
        %1277 = vmatpush1.msra.mxu0 0.0
        %1278 = vmatprep.subr.mxu0 0.0
        %1279 = vmatpush1.msra.mxu0 0.0
        %1280 = vmatprep.subr.mxu0 0.0
        %1281 = vmatpush1.msra.mxu0 0.0
        %1282 = vmatprep.subr.mxu0 0.0
        %1283 = vmatpush1.msra.mxu0 0.0
        %1284 = vmatprep.subr.mxu0 0.0
        %1285 = vmatpush1.msra.mxu0 0.0
        %1286 = vmatprep.subr.mxu0 0.0
        %1287 = vmatpush1.msra.mxu0 0.0
        %1288 = vmatprep.subr.mxu0 0.0
        %1289 = vmatpush1.msra.mxu0 0.0
        %1290 = vmatprep.subr.mxu0 0.0
        %1291 = vmatpush1.msra.mxu0 0.0
        %1292 = vmatprep.subr.mxu0 0.0
        %1293 = vmatpush1.msra.mxu0 0.0
        %1294 = vmatprep.subr.mxu0 0.0
        %1295 = vmatpush1.msra.mxu0 %v1262
        %1296 = vmatprep.subr.mxu0 0.0
        %1297 = vmatpush2.msra.mxu0 0.0
        %1298 = vmatprep.subr.mxu0 0.0
        %1299 = vmatpush2.msra.mxu0 0.0
        %1300 = vmatprep.subr.mxu0 0.0
        %1301 = vmatpush2.msra.mxu0 0.0
        %1302 = vmatprep.subr.mxu0 0.0
        %1303 = vmatpush2.msra.mxu0 0.0
        %1304 = vmatprep.subr.mxu0 0.0
        %1305 = vmatpush2.msra.mxu0 0.0
        %1306 = vmatprep.subr.mxu0 0.0
        %1307 = vmatpush2.msra.mxu0 0.0
        %1308 = vmatprep.subr.mxu0 0.0
        %1309 = vmatpush2.msra.mxu0 0.0
        %1310 = vmatprep.subr.mxu0 0.0
        %1311 = vmatpush2.msra.mxu0 0.0
        %1312 = vmatprep.subr.mxu0 0.0
        %1313 = vmatpush2.msra.mxu0 0.0
        %1314 = vmatprep.subr.mxu0 0.0
        %1315 = vmatpush2.msra.mxu0 0.0
        %1316 = vmatprep.subr.mxu0 0.0
        %1317 = vmatpush2.msra.mxu0 0.0
        %1318 = vmatprep.subr.mxu0 0.0
        %1319 = vmatpush2.msra.mxu0 0.0
        %1320 = vmatprep.subr.mxu0 0.0
        %1321 = vmatpush2.msra.mxu0 0.0
        %1322 = vmatprep.subr.mxu0 0.0
        %1323 = vmatpush2.msra.mxu0 0.0
        %1324 = vmatprep.subr.mxu0 0.0
        %1325 = vmatpush2.msra.mxu0 0.0
        %1326 = vmatprep.subr.mxu0 0.0
        %1327 = vmatpush2.msra.mxu0 0.0
        %1328 = vmatprep.mubr.f32.mxu0 0.0
        %1329 = vmatmul.mubr.f32.gmra.mxu0 %v1214
        %v1330 = vpop.f32.mrf.mxu0
        %v1331 = vadd.f32 0.0, %v1330
        %v1332 = vpop.f32.mrf.mxu0
        %1333 = vmatprep.mubr.f32.mxu0 0.0
        %1334 = vmatmul.mubr.f32.gmra.mxu0 %v1217
        %v1335 = vpop.f32.mrf.mxu0
        %v1336 = vadd.f32 0.0, %v1335
        %v1337 = vpop.f32.mrf.mxu0
        %1338 = vmatprep.mubr.f32.mxu0 0.0
        %1339 = vmatmul.mubr.f32.gmra.mxu0 %v1220
        %v1340 = vpop.f32.mrf.mxu0
        %v1341 = vadd.f32 0.0, %v1340
        %v1342 = vpop.f32.mrf.mxu0
        %1343 = vmatprep.mubr.f32.mxu0 0.0
        %1344 = vmatmul.mubr.f32.gmra.mxu0 %v1223
        %v1345 = vpop.f32.mrf.mxu0
        %v1346 = vadd.f32 0.0, %v1345
        %v1347 = vpop.f32.mrf.mxu0
        %1348 = vmatprep.mubr.f32.mxu0 0.0
        %1349 = vmatmul.mubr.f32.gmra.mxu0 %v1226
        %v1350 = vpop.f32.mrf.mxu0
        %v1351 = vadd.f32 0.0, %v1350
        %v1352 = vpop.f32.mrf.mxu0
        %1353 = vmatprep.mubr.f32.mxu0 0.0
        %1354 = vmatmul.mubr.f32.gmra.mxu0 %v1229
        %v1355 = vpop.f32.mrf.mxu0
        %v1356 = vadd.f32 0.0, %v1355
        %v1357 = vpop.f32.mrf.mxu0
        %1358 = vmatprep.mubr.f32.mxu0 0.0
        %1359 = vmatmul.mubr.f32.gmra.mxu0 %v1232
        %v1360 = vpop.f32.mrf.mxu0
        %v1361 = vadd.f32 0.0, %v1360
        %v1362 = vpop.f32.mrf.mxu0
        %1363 = vmatprep.mubr.f32.mxu0 0.0
        %1364 = vmatmul.mubr.f32.gmra.mxu0 %v1235
        %v1365 = vpop.f32.mrf.mxu0
        %v1366 = vadd.f32 0.0, %v1365
        %v1367 = vpop.f32.mrf.mxu0
        %1368 = vmatprep.mubr.f32.mxu0 0.0
        %1369 = vmatmul.mubr.f32.gmra.mxu0 %v1238
        %v1370 = vpop.f32.mrf.mxu0
        %v1371 = vadd.f32 0.0, %v1370
        %v1372 = vpop.f32.mrf.mxu0
        %1373 = vmatprep.mubr.f32.mxu0 0.0
        %1374 = vmatmul.mubr.f32.gmra.mxu0 %v1241
        %v1375 = vpop.f32.mrf.mxu0
        %v1376 = vadd.f32 0.0, %v1375
        %v1377 = vpop.f32.mrf.mxu0
        %1378 = vmatprep.mubr.f32.mxu0 0.0
        %1379 = vmatmul.mubr.f32.gmra.mxu0 %v1244
        %v1380 = vpop.f32.mrf.mxu0
        %v1381 = vadd.f32 0.0, %v1380
        %v1382 = vpop.f32.mrf.mxu0
        %1383 = vmatprep.mubr.f32.mxu0 0.0
        %1384 = vmatmul.mubr.f32.gmra.mxu0 %v1247
        %v1385 = vpop.f32.mrf.mxu0
        %v1386 = vadd.f32 0.0, %v1385
        %v1387 = vpop.f32.mrf.mxu0
        %1388 = vmatprep.mubr.f32.mxu0 0.0
        %1389 = vmatmul.mubr.f32.gmra.mxu0 %v1250
        %v1390 = vpop.f32.mrf.mxu0
        %v1391 = vadd.f32 0.0, %v1390
        %v1392 = vpop.f32.mrf.mxu0
        %1393 = vmatprep.mubr.f32.mxu0 0.0
        %1394 = vmatmul.mubr.f32.gmra.mxu0 %v1253
        %v1395 = vpop.f32.mrf.mxu0
        %v1396 = vadd.f32 0.0, %v1395
        %v1397 = vpop.f32.mrf.mxu0
        %1398 = vmatprep.mubr.f32.mxu0 0.0
        %1399 = vmatmul.mubr.f32.gmra.mxu0 %v1256
        %v1400 = vpop.f32.mrf.mxu0
        %v1401 = vadd.f32 0.0, %v1400
        %v1402 = vpop.f32.mrf.mxu0
        %1403 = vmatprep.mubr.f32.mxu0 0.0
        %1404 = vmatmul.mubr.f32.gmra.mxu0 %v1259
        %v1405 = vpop.f32.mrf.mxu0
        %v1406 = vadd.f32 0.0, %v1405
        %v1407 = vpop.f32.mrf.mxu0
        %1408 = vdwg.mxu0
        %v1409 = vadd.f32 %v1161, %v1331
        %v1410 = vadd.f32 %v1162, %v1336
        %v1411 = vadd.f32 %v1163, %v1341
        %v1412 = vadd.f32 %v1164, %v1346
        %v1413 = vadd.f32 %v1165, %v1351
        %v1414 = vadd.f32 %v1166, %v1356
        %v1415 = vadd.f32 %v1167, %v1361
        %v1416 = vadd.f32 %v1168, %v1366
        %v1417 = vadd.f32 %v1169, %v1371
        %v1418 = vadd.f32 %v1170, %v1376
        %v1419 = vadd.f32 %v1171, %v1381
        %v1420 = vadd.f32 %v1172, %v1386
        %v1421 = vadd.f32 %v1173, %v1391
        %v1422 = vadd.f32 %v1174, %v1396
        %v1423 = vadd.f32 %v1175, %v1401
        %v1424 = vadd.f32 %v1176, %v1406
        %s1425 = sadd.s32 %s447, 17
        %s1426 = scalar_lea.vmem %s440, %s1425
        %v1427 = vld [vmem:[%s1426] sm:$0xff]
        %v1428 = vld [vmem:[%s1426 + $0x8] sm:$0xff]
        %v1429 = vld [vmem:[%s1426 + $0x10] sm:$0xff]
        %v1430 = vld [vmem:[%s1426 + $0x18] sm:$0xff]
        %v1431 = vld [vmem:[%s1426 + $0x20] sm:$0xff]
        %v1432 = vld [vmem:[%s1426 + $0x28] sm:$0xff]
        %v1433 = vld [vmem:[%s1426 + $0x30] sm:$0xff]
        %v1434 = vld [vmem:[%s1426 + $0x38] sm:$0xff]
        %v1435 = vld [vmem:[%s1426 + $0x40] sm:$0xff]
        %v1436 = vld [vmem:[%s1426 + $0x48] sm:$0xff]
        %v1437 = vld [vmem:[%s1426 + $0x50] sm:$0xff]
        %v1438 = vld [vmem:[%s1426 + $0x58] sm:$0xff]
        %v1439 = vld [vmem:[%s1426 + $0x60] sm:$0xff]
        %v1440 = vld [vmem:[%s1426 + $0x68] sm:$0xff]
        %v1441 = vld [vmem:[%s1426 + $0x70] sm:$0xff]
        %v1442 = vld [vmem:[%s1426 + $0x78] sm:$0xff]
        %s1443 = scalar_lea.vmem %s2, 16
        %v1444 = vld [vmem:[%s1443] sm:$0xf]
        %v1446 = vsel %vm535, %v1427, 0
        %v1449 = vsel %vm535, %v1428, 0
        %v1452 = vsel %vm535, %v1429, 0
        %v1455 = vsel %vm535, %v1430, 0
        %v1458 = vsel %vm535, %v1431, 0
        %v1461 = vsel %vm535, %v1432, 0
        %v1464 = vsel %vm535, %v1433, 0
        %v1467 = vsel %vm535, %v1434, 0
        %v1470 = vsel %vm535, %v1435, 0
        %v1473 = vsel %vm535, %v1436, 0
        %v1476 = vsel %vm535, %v1437, 0
        %v1479 = vsel %vm535, %v1438, 0
        %v1482 = vsel %vm535, %v1439, 0
        %v1485 = vsel %vm535, %v1440, 0
        %v1488 = vsel %vm535, %v1441, 0
        %v1491 = vsel %vm535, %v1442, 0
        %v1494 = vsel %vm584, %v1444, 0
        %1496 = vmatprep.subr.mxu0 0.0
        %1497 = vmatpush1.msra.mxu0 0.0
        %1498 = vmatprep.subr.mxu0 0.0
        %1499 = vmatpush1.msra.mxu0 0.0
        %1500 = vmatprep.subr.mxu0 0.0
        %1501 = vmatpush1.msra.mxu0 0.0
        %1502 = vmatprep.subr.mxu0 0.0
        %1503 = vmatpush1.msra.mxu0 0.0
        %1504 = vmatprep.subr.mxu0 0.0
        %1505 = vmatpush1.msra.mxu0 0.0
        %1506 = vmatprep.subr.mxu0 0.0
        %1507 = vmatpush1.msra.mxu0 0.0
        %1508 = vmatprep.subr.mxu0 0.0
        %1509 = vmatpush1.msra.mxu0 0.0
        %1510 = vmatprep.subr.mxu0 0.0
        %1511 = vmatpush1.msra.mxu0 0.0
        %1512 = vmatprep.subr.mxu0 0.0
        %1513 = vmatpush1.msra.mxu0 0.0
        %1514 = vmatprep.subr.mxu0 0.0
        %1515 = vmatpush1.msra.mxu0 0.0
        %1516 = vmatprep.subr.mxu0 0.0
        %1517 = vmatpush1.msra.mxu0 0.0
        %1518 = vmatprep.subr.mxu0 0.0
        %1519 = vmatpush1.msra.mxu0 0.0
        %1520 = vmatprep.subr.mxu0 0.0
        %1521 = vmatpush1.msra.mxu0 0.0
        %1522 = vmatprep.subr.mxu0 0.0
        %1523 = vmatpush1.msra.mxu0 0.0
        %1524 = vmatprep.subr.mxu0 0.0
        %1525 = vmatpush1.msra.mxu0 0.0
        %1526 = vmatprep.subr.mxu0 0.0
        %1527 = vmatpush1.msra.mxu0 %v1494
        %1528 = vmatprep.subr.mxu0 0.0
        %1529 = vmatpush2.msra.mxu0 0.0
        %1530 = vmatprep.subr.mxu0 0.0
        %1531 = vmatpush2.msra.mxu0 0.0
        %1532 = vmatprep.subr.mxu0 0.0
        %1533 = vmatpush2.msra.mxu0 0.0
        %1534 = vmatprep.subr.mxu0 0.0
        %1535 = vmatpush2.msra.mxu0 0.0
        %1536 = vmatprep.subr.mxu0 0.0
        %1537 = vmatpush2.msra.mxu0 0.0
        %1538 = vmatprep.subr.mxu0 0.0
        %1539 = vmatpush2.msra.mxu0 0.0
        %1540 = vmatprep.subr.mxu0 0.0
        %1541 = vmatpush2.msra.mxu0 0.0
        %1542 = vmatprep.subr.mxu0 0.0
        %1543 = vmatpush2.msra.mxu0 0.0
        %1544 = vmatprep.subr.mxu0 0.0
        %1545 = vmatpush2.msra.mxu0 0.0
        %1546 = vmatprep.subr.mxu0 0.0
        %1547 = vmatpush2.msra.mxu0 0.0
        %1548 = vmatprep.subr.mxu0 0.0
        %1549 = vmatpush2.msra.mxu0 0.0
        %1550 = vmatprep.subr.mxu0 0.0
        %1551 = vmatpush2.msra.mxu0 0.0
        %1552 = vmatprep.subr.mxu0 0.0
        %1553 = vmatpush2.msra.mxu0 0.0
        %1554 = vmatprep.subr.mxu0 0.0
        %1555 = vmatpush2.msra.mxu0 0.0
        %1556 = vmatprep.subr.mxu0 0.0
        %1557 = vmatpush2.msra.mxu0 0.0
        %1558 = vmatprep.subr.mxu0 0.0
        %1559 = vmatpush2.msra.mxu0 0.0
        %1560 = vmatprep.mubr.f32.mxu0 0.0
        %1561 = vmatmul.mubr.f32.gmra.mxu0 %v1446
        %v1562 = vpop.f32.mrf.mxu0
        %v1563 = vadd.f32 0.0, %v1562
        %v1564 = vpop.f32.mrf.mxu0
        %1565 = vmatprep.mubr.f32.mxu0 0.0
        %1566 = vmatmul.mubr.f32.gmra.mxu0 %v1449
        %v1567 = vpop.f32.mrf.mxu0
        %v1568 = vadd.f32 0.0, %v1567
        %v1569 = vpop.f32.mrf.mxu0
        %1570 = vmatprep.mubr.f32.mxu0 0.0
        %1571 = vmatmul.mubr.f32.gmra.mxu0 %v1452
        %v1572 = vpop.f32.mrf.mxu0
        %v1573 = vadd.f32 0.0, %v1572
        %v1574 = vpop.f32.mrf.mxu0
        %1575 = vmatprep.mubr.f32.mxu0 0.0
        %1576 = vmatmul.mubr.f32.gmra.mxu0 %v1455
        %v1577 = vpop.f32.mrf.mxu0
        %v1578 = vadd.f32 0.0, %v1577
        %v1579 = vpop.f32.mrf.mxu0
        %1580 = vmatprep.mubr.f32.mxu0 0.0
        %1581 = vmatmul.mubr.f32.gmra.mxu0 %v1458
        %v1582 = vpop.f32.mrf.mxu0
        %v1583 = vadd.f32 0.0, %v1582
        %v1584 = vpop.f32.mrf.mxu0
        %1585 = vmatprep.mubr.f32.mxu0 0.0
        %1586 = vmatmul.mubr.f32.gmra.mxu0 %v1461
        %v1587 = vpop.f32.mrf.mxu0
        %v1588 = vadd.f32 0.0, %v1587
        %v1589 = vpop.f32.mrf.mxu0
        %1590 = vmatprep.mubr.f32.mxu0 0.0
        %1591 = vmatmul.mubr.f32.gmra.mxu0 %v1464
        %v1592 = vpop.f32.mrf.mxu0
        %v1593 = vadd.f32 0.0, %v1592
        %v1594 = vpop.f32.mrf.mxu0
        %1595 = vmatprep.mubr.f32.mxu0 0.0
        %1596 = vmatmul.mubr.f32.gmra.mxu0 %v1467
        %v1597 = vpop.f32.mrf.mxu0
        %v1598 = vadd.f32 0.0, %v1597
        %v1599 = vpop.f32.mrf.mxu0
        %1600 = vmatprep.mubr.f32.mxu0 0.0
        %1601 = vmatmul.mubr.f32.gmra.mxu0 %v1470
        %v1602 = vpop.f32.mrf.mxu0
        %v1603 = vadd.f32 0.0, %v1602
        %v1604 = vpop.f32.mrf.mxu0
        %1605 = vmatprep.mubr.f32.mxu0 0.0
        %1606 = vmatmul.mubr.f32.gmra.mxu0 %v1473
        %v1607 = vpop.f32.mrf.mxu0
        %v1608 = vadd.f32 0.0, %v1607
        %v1609 = vpop.f32.mrf.mxu0
        %1610 = vmatprep.mubr.f32.mxu0 0.0
        %1611 = vmatmul.mubr.f32.gmra.mxu0 %v1476
        %v1612 = vpop.f32.mrf.mxu0
        %v1613 = vadd.f32 0.0, %v1612
        %v1614 = vpop.f32.mrf.mxu0
        %1615 = vmatprep.mubr.f32.mxu0 0.0
        %1616 = vmatmul.mubr.f32.gmra.mxu0 %v1479
        %v1617 = vpop.f32.mrf.mxu0
        %v1618 = vadd.f32 0.0, %v1617
        %v1619 = vpop.f32.mrf.mxu0
        %1620 = vmatprep.mubr.f32.mxu0 0.0
        %1621 = vmatmul.mubr.f32.gmra.mxu0 %v1482
        %v1622 = vpop.f32.mrf.mxu0
        %v1623 = vadd.f32 0.0, %v1622
        %v1624 = vpop.f32.mrf.mxu0
        %1625 = vmatprep.mubr.f32.mxu0 0.0
        %1626 = vmatmul.mubr.f32.gmra.mxu0 %v1485
        %v1627 = vpop.f32.mrf.mxu0
        %v1628 = vadd.f32 0.0, %v1627
        %v1629 = vpop.f32.mrf.mxu0
        %1630 = vmatprep.mubr.f32.mxu0 0.0
        %1631 = vmatmul.mubr.f32.gmra.mxu0 %v1488
        %v1632 = vpop.f32.mrf.mxu0
        %v1633 = vadd.f32 0.0, %v1632
        %v1634 = vpop.f32.mrf.mxu0
        %1635 = vmatprep.mubr.f32.mxu0 0.0
        %1636 = vmatmul.mubr.f32.gmra.mxu0 %v1491
        %v1637 = vpop.f32.mrf.mxu0
        %v1638 = vadd.f32 0.0, %v1637
        %v1639 = vpop.f32.mrf.mxu0
        %1640 = vdwg.mxu0
        %v1641 = vadd.f32 %v1409, %v1563
        %v1642 = vadd.f32 %v1410, %v1568
        %v1643 = vadd.f32 %v1411, %v1573
        %v1644 = vadd.f32 %v1412, %v1578
        %v1645 = vadd.f32 %v1413, %v1583
        %v1646 = vadd.f32 %v1414, %v1588
        %v1647 = vadd.f32 %v1415, %v1593
        %v1648 = vadd.f32 %v1416, %v1598
        %v1649 = vadd.f32 %v1417, %v1603
        %v1650 = vadd.f32 %v1418, %v1608
        %v1651 = vadd.f32 %v1419, %v1613
        %v1652 = vadd.f32 %v1420, %v1618
        %v1653 = vadd.f32 %v1421, %v1623
        %v1654 = vadd.f32 %v1422, %v1628
        %v1655 = vadd.f32 %v1423, %v1633
        %v1656 = vadd.f32 %v1424, %v1638
        %s1657 = sadd.s32 %s447, 18
        %s1658 = scalar_lea.vmem %s440, %s1657
        %v1659 = vld [vmem:[%s1658] sm:$0xff]
        %v1660 = vld [vmem:[%s1658 + $0x8] sm:$0xff]
        %v1661 = vld [vmem:[%s1658 + $0x10] sm:$0xff]
        %v1662 = vld [vmem:[%s1658 + $0x18] sm:$0xff]
        %v1663 = vld [vmem:[%s1658 + $0x20] sm:$0xff]
        %v1664 = vld [vmem:[%s1658 + $0x28] sm:$0xff]
        %v1665 = vld [vmem:[%s1658 + $0x30] sm:$0xff]
        %v1666 = vld [vmem:[%s1658 + $0x38] sm:$0xff]
        %v1667 = vld [vmem:[%s1658 + $0x40] sm:$0xff]
        %v1668 = vld [vmem:[%s1658 + $0x48] sm:$0xff]
        %v1669 = vld [vmem:[%s1658 + $0x50] sm:$0xff]
        %v1670 = vld [vmem:[%s1658 + $0x58] sm:$0xff]
        %v1671 = vld [vmem:[%s1658 + $0x60] sm:$0xff]
        %v1672 = vld [vmem:[%s1658 + $0x68] sm:$0xff]
        %v1673 = vld [vmem:[%s1658 + $0x70] sm:$0xff]
        %v1674 = vld [vmem:[%s1658 + $0x78] sm:$0xff]
        %v1675 = vmul.f32 %v1659, %v465
        %v1676 = vmul.f32 %v1660, %v466
        %v1677 = vmul.f32 %v1661, %v467
        %v1678 = vmul.f32 %v1662, %v468
        %v1679 = vmul.f32 %v1663, %v469
        %v1680 = vmul.f32 %v1664, %v470
        %v1681 = vmul.f32 %v1665, %v471
        %v1682 = vmul.f32 %v1666, %v472
        %v1683 = vmul.f32 %v1667, %v473
        %v1684 = vmul.f32 %v1668, %v474
        %v1685 = vmul.f32 %v1669, %v475
        %v1686 = vmul.f32 %v1670, %v476
        %v1687 = vmul.f32 %v1671, %v477
        %v1688 = vmul.f32 %v1672, %v478
        %v1689 = vmul.f32 %v1673, %v479
        %v1690 = vmul.f32 %v1674, %v480
        %s1691 = scalar_lea.vmem %s2, 20
        %v1692 = vld [vmem:[%s1691] sm:$0xf]
        %v1694 = vsel %vm535, %v1675, 0
        %v1697 = vsel %vm535, %v1676, 0
        %v1700 = vsel %vm535, %v1677, 0
        %v1703 = vsel %vm535, %v1678, 0
        %v1706 = vsel %vm535, %v1679, 0
        %v1709 = vsel %vm535, %v1680, 0
        %v1712 = vsel %vm535, %v1681, 0
        %v1715 = vsel %vm535, %v1682, 0
        %v1718 = vsel %vm535, %v1683, 0
        %v1721 = vsel %vm535, %v1684, 0
        %v1724 = vsel %vm535, %v1685, 0
        %v1727 = vsel %vm535, %v1686, 0
        %v1730 = vsel %vm535, %v1687, 0
        %v1733 = vsel %vm535, %v1688, 0
        %v1736 = vsel %vm535, %v1689, 0
        %v1739 = vsel %vm535, %v1690, 0
        %v1742 = vsel %vm584, %v1692, 0
        %1744 = vmatprep.subr.mxu0 0.0
        %1745 = vmatpush1.msra.mxu0 0.0
        %1746 = vmatprep.subr.mxu0 0.0
        %1747 = vmatpush1.msra.mxu0 0.0
        %1748 = vmatprep.subr.mxu0 0.0
        %1749 = vmatpush1.msra.mxu0 0.0
        %1750 = vmatprep.subr.mxu0 0.0
        %1751 = vmatpush1.msra.mxu0 0.0
        %1752 = vmatprep.subr.mxu0 0.0
        %1753 = vmatpush1.msra.mxu0 0.0
        %1754 = vmatprep.subr.mxu0 0.0
        %1755 = vmatpush1.msra.mxu0 0.0
        %1756 = vmatprep.subr.mxu0 0.0
        %1757 = vmatpush1.msra.mxu0 0.0
        %1758 = vmatprep.subr.mxu0 0.0
        %1759 = vmatpush1.msra.mxu0 0.0
        %1760 = vmatprep.subr.mxu0 0.0
        %1761 = vmatpush1.msra.mxu0 0.0
        %1762 = vmatprep.subr.mxu0 0.0
        %1763 = vmatpush1.msra.mxu0 0.0
        %1764 = vmatprep.subr.mxu0 0.0
        %1765 = vmatpush1.msra.mxu0 0.0
        %1766 = vmatprep.subr.mxu0 0.0
        %1767 = vmatpush1.msra.mxu0 0.0
        %1768 = vmatprep.subr.mxu0 0.0
        %1769 = vmatpush1.msra.mxu0 0.0
        %1770 = vmatprep.subr.mxu0 0.0
        %1771 = vmatpush1.msra.mxu0 0.0
        %1772 = vmatprep.subr.mxu0 0.0
        %1773 = vmatpush1.msra.mxu0 0.0
        %1774 = vmatprep.subr.mxu0 0.0
        %1775 = vmatpush1.msra.mxu0 %v1742
        %1776 = vmatprep.subr.mxu0 0.0
        %1777 = vmatpush2.msra.mxu0 0.0
        %1778 = vmatprep.subr.mxu0 0.0
        %1779 = vmatpush2.msra.mxu0 0.0
        %1780 = vmatprep.subr.mxu0 0.0
        %1781 = vmatpush2.msra.mxu0 0.0
        %1782 = vmatprep.subr.mxu0 0.0
        %1783 = vmatpush2.msra.mxu0 0.0
        %1784 = vmatprep.subr.mxu0 0.0
        %1785 = vmatpush2.msra.mxu0 0.0
        %1786 = vmatprep.subr.mxu0 0.0
        %1787 = vmatpush2.msra.mxu0 0.0
        %1788 = vmatprep.subr.mxu0 0.0
        %1789 = vmatpush2.msra.mxu0 0.0
        %1790 = vmatprep.subr.mxu0 0.0
        %1791 = vmatpush2.msra.mxu0 0.0
        %1792 = vmatprep.subr.mxu0 0.0
        %1793 = vmatpush2.msra.mxu0 0.0
        %1794 = vmatprep.subr.mxu0 0.0
        %1795 = vmatpush2.msra.mxu0 0.0
        %1796 = vmatprep.subr.mxu0 0.0
        %1797 = vmatpush2.msra.mxu0 0.0
        %1798 = vmatprep.subr.mxu0 0.0
        %1799 = vmatpush2.msra.mxu0 0.0
        %1800 = vmatprep.subr.mxu0 0.0
        %1801 = vmatpush2.msra.mxu0 0.0
        %1802 = vmatprep.subr.mxu0 0.0
        %1803 = vmatpush2.msra.mxu0 0.0
        %1804 = vmatprep.subr.mxu0 0.0
        %1805 = vmatpush2.msra.mxu0 0.0
        %1806 = vmatprep.subr.mxu0 0.0
        %1807 = vmatpush2.msra.mxu0 0.0
        %1808 = vmatprep.mubr.f32.mxu0 0.0
        %1809 = vmatmul.mubr.f32.gmra.mxu0 %v1694
        %v1810 = vpop.f32.mrf.mxu0
        %v1811 = vadd.f32 0.0, %v1810
        %v1812 = vpop.f32.mrf.mxu0
        %1813 = vmatprep.mubr.f32.mxu0 0.0
        %1814 = vmatmul.mubr.f32.gmra.mxu0 %v1697
        %v1815 = vpop.f32.mrf.mxu0
        %v1816 = vadd.f32 0.0, %v1815
        %v1817 = vpop.f32.mrf.mxu0
        %1818 = vmatprep.mubr.f32.mxu0 0.0
        %1819 = vmatmul.mubr.f32.gmra.mxu0 %v1700
        %v1820 = vpop.f32.mrf.mxu0
        %v1821 = vadd.f32 0.0, %v1820
        %v1822 = vpop.f32.mrf.mxu0
        %1823 = vmatprep.mubr.f32.mxu0 0.0
        %1824 = vmatmul.mubr.f32.gmra.mxu0 %v1703
        %v1825 = vpop.f32.mrf.mxu0
        %v1826 = vadd.f32 0.0, %v1825
        %v1827 = vpop.f32.mrf.mxu0
        %1828 = vmatprep.mubr.f32.mxu0 0.0
        %1829 = vmatmul.mubr.f32.gmra.mxu0 %v1706
        %v1830 = vpop.f32.mrf.mxu0
        %v1831 = vadd.f32 0.0, %v1830
        %v1832 = vpop.f32.mrf.mxu0
        %1833 = vmatprep.mubr.f32.mxu0 0.0
        %1834 = vmatmul.mubr.f32.gmra.mxu0 %v1709
        %v1835 = vpop.f32.mrf.mxu0
        %v1836 = vadd.f32 0.0, %v1835
        %v1837 = vpop.f32.mrf.mxu0
        %1838 = vmatprep.mubr.f32.mxu0 0.0
        %1839 = vmatmul.mubr.f32.gmra.mxu0 %v1712
        %v1840 = vpop.f32.mrf.mxu0
        %v1841 = vadd.f32 0.0, %v1840
        %v1842 = vpop.f32.mrf.mxu0
        %1843 = vmatprep.mubr.f32.mxu0 0.0
        %1844 = vmatmul.mubr.f32.gmra.mxu0 %v1715
        %v1845 = vpop.f32.mrf.mxu0
        %v1846 = vadd.f32 0.0, %v1845
        %v1847 = vpop.f32.mrf.mxu0
        %1848 = vmatprep.mubr.f32.mxu0 0.0
        %1849 = vmatmul.mubr.f32.gmra.mxu0 %v1718
        %v1850 = vpop.f32.mrf.mxu0
        %v1851 = vadd.f32 0.0, %v1850
        %v1852 = vpop.f32.mrf.mxu0
        %1853 = vmatprep.mubr.f32.mxu0 0.0
        %1854 = vmatmul.mubr.f32.gmra.mxu0 %v1721
        %v1855 = vpop.f32.mrf.mxu0
        %v1856 = vadd.f32 0.0, %v1855
        %v1857 = vpop.f32.mrf.mxu0
        %1858 = vmatprep.mubr.f32.mxu0 0.0
        %1859 = vmatmul.mubr.f32.gmra.mxu0 %v1724
        %v1860 = vpop.f32.mrf.mxu0
        %v1861 = vadd.f32 0.0, %v1860
        %v1862 = vpop.f32.mrf.mxu0
        %1863 = vmatprep.mubr.f32.mxu0 0.0
        %1864 = vmatmul.mubr.f32.gmra.mxu0 %v1727
        %v1865 = vpop.f32.mrf.mxu0
        %v1866 = vadd.f32 0.0, %v1865
        %v1867 = vpop.f32.mrf.mxu0
        %1868 = vmatprep.mubr.f32.mxu0 0.0
        %1869 = vmatmul.mubr.f32.gmra.mxu0 %v1730
        %v1870 = vpop.f32.mrf.mxu0
        %v1871 = vadd.f32 0.0, %v1870
        %v1872 = vpop.f32.mrf.mxu0
        %1873 = vmatprep.mubr.f32.mxu0 0.0
        %1874 = vmatmul.mubr.f32.gmra.mxu0 %v1733
        %v1875 = vpop.f32.mrf.mxu0
        %v1876 = vadd.f32 0.0, %v1875
        %v1877 = vpop.f32.mrf.mxu0
        %1878 = vmatprep.mubr.f32.mxu0 0.0
        %1879 = vmatmul.mubr.f32.gmra.mxu0 %v1736
        %v1880 = vpop.f32.mrf.mxu0
        %v1881 = vadd.f32 0.0, %v1880
        %v1882 = vpop.f32.mrf.mxu0
        %1883 = vmatprep.mubr.f32.mxu0 0.0
        %1884 = vmatmul.mubr.f32.gmra.mxu0 %v1739
        %v1885 = vpop.f32.mrf.mxu0
        %v1886 = vadd.f32 0.0, %v1885
        %v1887 = vpop.f32.mrf.mxu0
        %1888 = vdwg.mxu0
        %v1889 = vadd.f32 %v1641, %v1811
        %v1890 = vadd.f32 %v1642, %v1816
        %v1891 = vadd.f32 %v1643, %v1821
        %v1892 = vadd.f32 %v1644, %v1826
        %v1893 = vadd.f32 %v1645, %v1831
        %v1894 = vadd.f32 %v1646, %v1836
        %v1895 = vadd.f32 %v1647, %v1841
        %v1896 = vadd.f32 %v1648, %v1846
        %v1897 = vadd.f32 %v1649, %v1851
        %v1898 = vadd.f32 %v1650, %v1856
        %v1899 = vadd.f32 %v1651, %v1861
        %v1900 = vadd.f32 %v1652, %v1866
        %v1901 = vadd.f32 %v1653, %v1871
        %v1902 = vadd.f32 %v1654, %v1876
        %v1903 = vadd.f32 %v1655, %v1881
        %v1904 = vadd.f32 %v1656, %v1886
        %s1905 = sadd.s32 %s447, 32
        %s1906 = scalar_lea.vmem %s440, %s1905
        %v1907 = vld [vmem:[%s1906] sm:$0xff]
        %v1908 = vld [vmem:[%s1906 + $0x8] sm:$0xff]
        %v1909 = vld [vmem:[%s1906 + $0x10] sm:$0xff]
        %v1910 = vld [vmem:[%s1906 + $0x18] sm:$0xff]
        %v1911 = vld [vmem:[%s1906 + $0x20] sm:$0xff]
        %v1912 = vld [vmem:[%s1906 + $0x28] sm:$0xff]
        %v1913 = vld [vmem:[%s1906 + $0x30] sm:$0xff]
        %v1914 = vld [vmem:[%s1906 + $0x38] sm:$0xff]
        %v1915 = vld [vmem:[%s1906 + $0x40] sm:$0xff]
        %v1916 = vld [vmem:[%s1906 + $0x48] sm:$0xff]
        %v1917 = vld [vmem:[%s1906 + $0x50] sm:$0xff]
        %v1918 = vld [vmem:[%s1906 + $0x58] sm:$0xff]
        %v1919 = vld [vmem:[%s1906 + $0x60] sm:$0xff]
        %v1920 = vld [vmem:[%s1906 + $0x68] sm:$0xff]
        %v1921 = vld [vmem:[%s1906 + $0x70] sm:$0xff]
        %v1922 = vld [vmem:[%s1906 + $0x78] sm:$0xff]
        %v1923 = vmul.f32 %v1907, %v448
        %v1924 = vmul.f32 %v1908, %v449
        %v1925 = vmul.f32 %v1909, %v450
        %v1926 = vmul.f32 %v1910, %v451
        %v1927 = vmul.f32 %v1911, %v452
        %v1928 = vmul.f32 %v1912, %v453
        %v1929 = vmul.f32 %v1913, %v454
        %v1930 = vmul.f32 %v1914, %v455
        %v1931 = vmul.f32 %v1915, %v456
        %v1932 = vmul.f32 %v1916, %v457
        %v1933 = vmul.f32 %v1917, %v458
        %v1934 = vmul.f32 %v1918, %v459
        %v1935 = vmul.f32 %v1919, %v460
        %v1936 = vmul.f32 %v1920, %v461
        %v1937 = vmul.f32 %v1921, %v462
        %v1938 = vmul.f32 %v1922, %v463
        %s1939 = scalar_lea.vmem %s2, 24
        %v1940 = vld [vmem:[%s1939] sm:$0xf]
        %v1942 = vsel %vm535, %v1923, 0
        %v1945 = vsel %vm535, %v1924, 0
        %v1948 = vsel %vm535, %v1925, 0
        %v1951 = vsel %vm535, %v1926, 0
        %v1954 = vsel %vm535, %v1927, 0
        %v1957 = vsel %vm535, %v1928, 0
        %v1960 = vsel %vm535, %v1929, 0
        %v1963 = vsel %vm535, %v1930, 0
        %v1966 = vsel %vm535, %v1931, 0
        %v1969 = vsel %vm535, %v1932, 0
        %v1972 = vsel %vm535, %v1933, 0
        %v1975 = vsel %vm535, %v1934, 0
        %v1978 = vsel %vm535, %v1935, 0
        %v1981 = vsel %vm535, %v1936, 0
        %v1984 = vsel %vm535, %v1937, 0
        %v1987 = vsel %vm535, %v1938, 0
        %v1990 = vsel %vm584, %v1940, 0
        %1992 = vmatprep.subr.mxu0 0.0
        %1993 = vmatpush1.msra.mxu0 0.0
        %1994 = vmatprep.subr.mxu0 0.0
        %1995 = vmatpush1.msra.mxu0 0.0
        %1996 = vmatprep.subr.mxu0 0.0
        %1997 = vmatpush1.msra.mxu0 0.0
        %1998 = vmatprep.subr.mxu0 0.0
        %1999 = vmatpush1.msra.mxu0 0.0
        %2000 = vmatprep.subr.mxu0 0.0
        %2001 = vmatpush1.msra.mxu0 0.0
        %2002 = vmatprep.subr.mxu0 0.0
        %2003 = vmatpush1.msra.mxu0 0.0
        %2004 = vmatprep.subr.mxu0 0.0
        %2005 = vmatpush1.msra.mxu0 0.0
        %2006 = vmatprep.subr.mxu0 0.0
        %2007 = vmatpush1.msra.mxu0 0.0
        %2008 = vmatprep.subr.mxu0 0.0
        %2009 = vmatpush1.msra.mxu0 0.0
        %2010 = vmatprep.subr.mxu0 0.0
        %2011 = vmatpush1.msra.mxu0 0.0
        %2012 = vmatprep.subr.mxu0 0.0
        %2013 = vmatpush1.msra.mxu0 0.0
        %2014 = vmatprep.subr.mxu0 0.0
        %2015 = vmatpush1.msra.mxu0 0.0
        %2016 = vmatprep.subr.mxu0 0.0
        %2017 = vmatpush1.msra.mxu0 0.0
        %2018 = vmatprep.subr.mxu0 0.0
        %2019 = vmatpush1.msra.mxu0 0.0
        %2020 = vmatprep.subr.mxu0 0.0
        %2021 = vmatpush1.msra.mxu0 0.0
        %2022 = vmatprep.subr.mxu0 0.0
        %2023 = vmatpush1.msra.mxu0 %v1990
        %2024 = vmatprep.subr.mxu0 0.0
        %2025 = vmatpush2.msra.mxu0 0.0
        %2026 = vmatprep.subr.mxu0 0.0
        %2027 = vmatpush2.msra.mxu0 0.0
        %2028 = vmatprep.subr.mxu0 0.0
        %2029 = vmatpush2.msra.mxu0 0.0
        %2030 = vmatprep.subr.mxu0 0.0
        %2031 = vmatpush2.msra.mxu0 0.0
        %2032 = vmatprep.subr.mxu0 0.0
        %2033 = vmatpush2.msra.mxu0 0.0
        %2034 = vmatprep.subr.mxu0 0.0
        %2035 = vmatpush2.msra.mxu0 0.0
        %2036 = vmatprep.subr.mxu0 0.0
        %2037 = vmatpush2.msra.mxu0 0.0
        %2038 = vmatprep.subr.mxu0 0.0
        %2039 = vmatpush2.msra.mxu0 0.0
        %2040 = vmatprep.subr.mxu0 0.0
        %2041 = vmatpush2.msra.mxu0 0.0
        %2042 = vmatprep.subr.mxu0 0.0
        %2043 = vmatpush2.msra.mxu0 0.0
        %2044 = vmatprep.subr.mxu0 0.0
        %2045 = vmatpush2.msra.mxu0 0.0
        %2046 = vmatprep.subr.mxu0 0.0
        %2047 = vmatpush2.msra.mxu0 0.0
        %2048 = vmatprep.subr.mxu0 0.0
        %2049 = vmatpush2.msra.mxu0 0.0
        %2050 = vmatprep.subr.mxu0 0.0
        %2051 = vmatpush2.msra.mxu0 0.0
        %2052 = vmatprep.subr.mxu0 0.0
        %2053 = vmatpush2.msra.mxu0 0.0
        %2054 = vmatprep.subr.mxu0 0.0
        %2055 = vmatpush2.msra.mxu0 0.0
        %2056 = vmatprep.mubr.f32.mxu0 0.0
        %2057 = vmatmul.mubr.f32.gmra.mxu0 %v1942
        %v2058 = vpop.f32.mrf.mxu0
        %v2059 = vadd.f32 0.0, %v2058
        %v2060 = vpop.f32.mrf.mxu0
        %2061 = vmatprep.mubr.f32.mxu0 0.0
        %2062 = vmatmul.mubr.f32.gmra.mxu0 %v1945
        %v2063 = vpop.f32.mrf.mxu0
        %v2064 = vadd.f32 0.0, %v2063
        %v2065 = vpop.f32.mrf.mxu0
        %2066 = vmatprep.mubr.f32.mxu0 0.0
        %2067 = vmatmul.mubr.f32.gmra.mxu0 %v1948
        %v2068 = vpop.f32.mrf.mxu0
        %v2069 = vadd.f32 0.0, %v2068
        %v2070 = vpop.f32.mrf.mxu0
        %2071 = vmatprep.mubr.f32.mxu0 0.0
        %2072 = vmatmul.mubr.f32.gmra.mxu0 %v1951
        %v2073 = vpop.f32.mrf.mxu0
        %v2074 = vadd.f32 0.0, %v2073
        %v2075 = vpop.f32.mrf.mxu0
        %2076 = vmatprep.mubr.f32.mxu0 0.0
        %2077 = vmatmul.mubr.f32.gmra.mxu0 %v1954
        %v2078 = vpop.f32.mrf.mxu0
        %v2079 = vadd.f32 0.0, %v2078
        %v2080 = vpop.f32.mrf.mxu0
        %2081 = vmatprep.mubr.f32.mxu0 0.0
        %2082 = vmatmul.mubr.f32.gmra.mxu0 %v1957
        %v2083 = vpop.f32.mrf.mxu0
        %v2084 = vadd.f32 0.0, %v2083
        %v2085 = vpop.f32.mrf.mxu0
        %2086 = vmatprep.mubr.f32.mxu0 0.0
        %2087 = vmatmul.mubr.f32.gmra.mxu0 %v1960
        %v2088 = vpop.f32.mrf.mxu0
        %v2089 = vadd.f32 0.0, %v2088
        %v2090 = vpop.f32.mrf.mxu0
        %2091 = vmatprep.mubr.f32.mxu0 0.0
        %2092 = vmatmul.mubr.f32.gmra.mxu0 %v1963
        %v2093 = vpop.f32.mrf.mxu0
        %v2094 = vadd.f32 0.0, %v2093
        %v2095 = vpop.f32.mrf.mxu0
        %2096 = vmatprep.mubr.f32.mxu0 0.0
        %2097 = vmatmul.mubr.f32.gmra.mxu0 %v1966
        %v2098 = vpop.f32.mrf.mxu0
        %v2099 = vadd.f32 0.0, %v2098
        %v2100 = vpop.f32.mrf.mxu0
        %2101 = vmatprep.mubr.f32.mxu0 0.0
        %2102 = vmatmul.mubr.f32.gmra.mxu0 %v1969
        %v2103 = vpop.f32.mrf.mxu0
        %v2104 = vadd.f32 0.0, %v2103
        %v2105 = vpop.f32.mrf.mxu0
        %2106 = vmatprep.mubr.f32.mxu0 0.0
        %2107 = vmatmul.mubr.f32.gmra.mxu0 %v1972
        %v2108 = vpop.f32.mrf.mxu0
        %v2109 = vadd.f32 0.0, %v2108
        %v2110 = vpop.f32.mrf.mxu0
        %2111 = vmatprep.mubr.f32.mxu0 0.0
        %2112 = vmatmul.mubr.f32.gmra.mxu0 %v1975
        %v2113 = vpop.f32.mrf.mxu0
        %v2114 = vadd.f32 0.0, %v2113
        %v2115 = vpop.f32.mrf.mxu0
        %2116 = vmatprep.mubr.f32.mxu0 0.0
        %2117 = vmatmul.mubr.f32.gmra.mxu0 %v1978
        %v2118 = vpop.f32.mrf.mxu0
        %v2119 = vadd.f32 0.0, %v2118
        %v2120 = vpop.f32.mrf.mxu0
        %2121 = vmatprep.mubr.f32.mxu0 0.0
        %2122 = vmatmul.mubr.f32.gmra.mxu0 %v1981
        %v2123 = vpop.f32.mrf.mxu0
        %v2124 = vadd.f32 0.0, %v2123
        %v2125 = vpop.f32.mrf.mxu0
        %2126 = vmatprep.mubr.f32.mxu0 0.0
        %2127 = vmatmul.mubr.f32.gmra.mxu0 %v1984
        %v2128 = vpop.f32.mrf.mxu0
        %v2129 = vadd.f32 0.0, %v2128
        %v2130 = vpop.f32.mrf.mxu0
        %2131 = vmatprep.mubr.f32.mxu0 0.0
        %2132 = vmatmul.mubr.f32.gmra.mxu0 %v1987
        %v2133 = vpop.f32.mrf.mxu0
        %v2134 = vadd.f32 0.0, %v2133
        %v2135 = vpop.f32.mrf.mxu0
        %2136 = vdwg.mxu0
        %v2137 = vadd.f32 %v1889, %v2059
        %v2138 = vadd.f32 %v1890, %v2064
        %v2139 = vadd.f32 %v1891, %v2069
        %v2140 = vadd.f32 %v1892, %v2074
        %v2141 = vadd.f32 %v1893, %v2079
        %v2142 = vadd.f32 %v1894, %v2084
        %v2143 = vadd.f32 %v1895, %v2089
        %v2144 = vadd.f32 %v1896, %v2094
        %v2145 = vadd.f32 %v1897, %v2099
        %v2146 = vadd.f32 %v1898, %v2104
        %v2147 = vadd.f32 %v1899, %v2109
        %v2148 = vadd.f32 %v1900, %v2114
        %v2149 = vadd.f32 %v1901, %v2119
        %v2150 = vadd.f32 %v1902, %v2124
        %v2151 = vadd.f32 %v1903, %v2129
        %v2152 = vadd.f32 %v1904, %v2134
        %s2153 = sadd.s32 %s447, 33
        %s2154 = scalar_lea.vmem %s440, %s2153
        %v2155 = vld [vmem:[%s2154] sm:$0xff]
        %v2156 = vld [vmem:[%s2154 + $0x8] sm:$0xff]
        %v2157 = vld [vmem:[%s2154 + $0x10] sm:$0xff]
        %v2158 = vld [vmem:[%s2154 + $0x18] sm:$0xff]
        %v2159 = vld [vmem:[%s2154 + $0x20] sm:$0xff]
        %v2160 = vld [vmem:[%s2154 + $0x28] sm:$0xff]
        %v2161 = vld [vmem:[%s2154 + $0x30] sm:$0xff]
        %v2162 = vld [vmem:[%s2154 + $0x38] sm:$0xff]
        %v2163 = vld [vmem:[%s2154 + $0x40] sm:$0xff]
        %v2164 = vld [vmem:[%s2154 + $0x48] sm:$0xff]
        %v2165 = vld [vmem:[%s2154 + $0x50] sm:$0xff]
        %v2166 = vld [vmem:[%s2154 + $0x58] sm:$0xff]
        %v2167 = vld [vmem:[%s2154 + $0x60] sm:$0xff]
        %v2168 = vld [vmem:[%s2154 + $0x68] sm:$0xff]
        %v2169 = vld [vmem:[%s2154 + $0x70] sm:$0xff]
        %v2170 = vld [vmem:[%s2154 + $0x78] sm:$0xff]
        %s2171 = scalar_lea.vmem %s2, 28
        %v2172 = vld [vmem:[%s2171] sm:$0xf]
        %v2174 = vsel %vm535, %v2155, 0
        %v2177 = vsel %vm535, %v2156, 0
        %v2180 = vsel %vm535, %v2157, 0
        %v2183 = vsel %vm535, %v2158, 0
        %v2186 = vsel %vm535, %v2159, 0
        %v2189 = vsel %vm535, %v2160, 0
        %v2192 = vsel %vm535, %v2161, 0
        %v2195 = vsel %vm535, %v2162, 0
        %v2198 = vsel %vm535, %v2163, 0
        %v2201 = vsel %vm535, %v2164, 0
        %v2204 = vsel %vm535, %v2165, 0
        %v2207 = vsel %vm535, %v2166, 0
        %v2210 = vsel %vm535, %v2167, 0
        %v2213 = vsel %vm535, %v2168, 0
        %v2216 = vsel %vm535, %v2169, 0
        %v2219 = vsel %vm535, %v2170, 0
        %v2222 = vsel %vm584, %v2172, 0
        %2224 = vmatprep.subr.mxu0 0.0
        %2225 = vmatpush1.msra.mxu0 0.0
        %2226 = vmatprep.subr.mxu0 0.0
        %2227 = vmatpush1.msra.mxu0 0.0
        %2228 = vmatprep.subr.mxu0 0.0
        %2229 = vmatpush1.msra.mxu0 0.0
        %2230 = vmatprep.subr.mxu0 0.0
        %2231 = vmatpush1.msra.mxu0 0.0
        %2232 = vmatprep.subr.mxu0 0.0
        %2233 = vmatpush1.msra.mxu0 0.0
        %2234 = vmatprep.subr.mxu0 0.0
        %2235 = vmatpush1.msra.mxu0 0.0
        %2236 = vmatprep.subr.mxu0 0.0
        %2237 = vmatpush1.msra.mxu0 0.0
        %2238 = vmatprep.subr.mxu0 0.0
        %2239 = vmatpush1.msra.mxu0 0.0
        %2240 = vmatprep.subr.mxu0 0.0
        %2241 = vmatpush1.msra.mxu0 0.0
        %2242 = vmatprep.subr.mxu0 0.0
        %2243 = vmatpush1.msra.mxu0 0.0
        %2244 = vmatprep.subr.mxu0 0.0
        %2245 = vmatpush1.msra.mxu0 0.0
        %2246 = vmatprep.subr.mxu0 0.0
        %2247 = vmatpush1.msra.mxu0 0.0
        %2248 = vmatprep.subr.mxu0 0.0
        %2249 = vmatpush1.msra.mxu0 0.0
        %2250 = vmatprep.subr.mxu0 0.0
        %2251 = vmatpush1.msra.mxu0 0.0
        %2252 = vmatprep.subr.mxu0 0.0
        %2253 = vmatpush1.msra.mxu0 0.0
        %2254 = vmatprep.subr.mxu0 0.0
        %2255 = vmatpush1.msra.mxu0 %v2222
        %2256 = vmatprep.subr.mxu0 0.0
        %2257 = vmatpush2.msra.mxu0 0.0
        %2258 = vmatprep.subr.mxu0 0.0
        %2259 = vmatpush2.msra.mxu0 0.0
        %2260 = vmatprep.subr.mxu0 0.0
        %2261 = vmatpush2.msra.mxu0 0.0
        %2262 = vmatprep.subr.mxu0 0.0
        %2263 = vmatpush2.msra.mxu0 0.0
        %2264 = vmatprep.subr.mxu0 0.0
        %2265 = vmatpush2.msra.mxu0 0.0
        %2266 = vmatprep.subr.mxu0 0.0
        %2267 = vmatpush2.msra.mxu0 0.0
        %2268 = vmatprep.subr.mxu0 0.0
        %2269 = vmatpush2.msra.mxu0 0.0
        %2270 = vmatprep.subr.mxu0 0.0
        %2271 = vmatpush2.msra.mxu0 0.0
        %2272 = vmatprep.subr.mxu0 0.0
        %2273 = vmatpush2.msra.mxu0 0.0
        %2274 = vmatprep.subr.mxu0 0.0
        %2275 = vmatpush2.msra.mxu0 0.0
        %2276 = vmatprep.subr.mxu0 0.0
        %2277 = vmatpush2.msra.mxu0 0.0
        %2278 = vmatprep.subr.mxu0 0.0
        %2279 = vmatpush2.msra.mxu0 0.0
        %2280 = vmatprep.subr.mxu0 0.0
        %2281 = vmatpush2.msra.mxu0 0.0
        %2282 = vmatprep.subr.mxu0 0.0
        %2283 = vmatpush2.msra.mxu0 0.0
        %2284 = vmatprep.subr.mxu0 0.0
        %2285 = vmatpush2.msra.mxu0 0.0
        %2286 = vmatprep.subr.mxu0 0.0
        %2287 = vmatpush2.msra.mxu0 0.0
        %2288 = vmatprep.mubr.f32.mxu0 0.0
        %2289 = vmatmul.mubr.f32.gmra.mxu0 %v2174
        %v2290 = vpop.f32.mrf.mxu0
        %v2291 = vadd.f32 0.0, %v2290
        %v2292 = vpop.f32.mrf.mxu0
        %2293 = vmatprep.mubr.f32.mxu0 0.0
        %2294 = vmatmul.mubr.f32.gmra.mxu0 %v2177
        %v2295 = vpop.f32.mrf.mxu0
        %v2296 = vadd.f32 0.0, %v2295
        %v2297 = vpop.f32.mrf.mxu0
        %2298 = vmatprep.mubr.f32.mxu0 0.0
        %2299 = vmatmul.mubr.f32.gmra.mxu0 %v2180
        %v2300 = vpop.f32.mrf.mxu0
        %v2301 = vadd.f32 0.0, %v2300
        %v2302 = vpop.f32.mrf.mxu0
        %2303 = vmatprep.mubr.f32.mxu0 0.0
        %2304 = vmatmul.mubr.f32.gmra.mxu0 %v2183
        %v2305 = vpop.f32.mrf.mxu0
        %v2306 = vadd.f32 0.0, %v2305
        %v2307 = vpop.f32.mrf.mxu0
        %2308 = vmatprep.mubr.f32.mxu0 0.0
        %2309 = vmatmul.mubr.f32.gmra.mxu0 %v2186
        %v2310 = vpop.f32.mrf.mxu0
        %v2311 = vadd.f32 0.0, %v2310
        %v2312 = vpop.f32.mrf.mxu0
        %2313 = vmatprep.mubr.f32.mxu0 0.0
        %2314 = vmatmul.mubr.f32.gmra.mxu0 %v2189
        %v2315 = vpop.f32.mrf.mxu0
        %v2316 = vadd.f32 0.0, %v2315
        %v2317 = vpop.f32.mrf.mxu0
        %2318 = vmatprep.mubr.f32.mxu0 0.0
        %2319 = vmatmul.mubr.f32.gmra.mxu0 %v2192
        %v2320 = vpop.f32.mrf.mxu0
        %v2321 = vadd.f32 0.0, %v2320
        %v2322 = vpop.f32.mrf.mxu0
        %2323 = vmatprep.mubr.f32.mxu0 0.0
        %2324 = vmatmul.mubr.f32.gmra.mxu0 %v2195
        %v2325 = vpop.f32.mrf.mxu0
        %v2326 = vadd.f32 0.0, %v2325
        %v2327 = vpop.f32.mrf.mxu0
        %2328 = vmatprep.mubr.f32.mxu0 0.0
        %2329 = vmatmul.mubr.f32.gmra.mxu0 %v2198
        %v2330 = vpop.f32.mrf.mxu0
        %v2331 = vadd.f32 0.0, %v2330
        %v2332 = vpop.f32.mrf.mxu0
        %2333 = vmatprep.mubr.f32.mxu0 0.0
        %2334 = vmatmul.mubr.f32.gmra.mxu0 %v2201
        %v2335 = vpop.f32.mrf.mxu0
        %v2336 = vadd.f32 0.0, %v2335
        %v2337 = vpop.f32.mrf.mxu0
        %2338 = vmatprep.mubr.f32.mxu0 0.0
        %2339 = vmatmul.mubr.f32.gmra.mxu0 %v2204
        %v2340 = vpop.f32.mrf.mxu0
        %v2341 = vadd.f32 0.0, %v2340
        %v2342 = vpop.f32.mrf.mxu0
        %2343 = vmatprep.mubr.f32.mxu0 0.0
        %2344 = vmatmul.mubr.f32.gmra.mxu0 %v2207
        %v2345 = vpop.f32.mrf.mxu0
        %v2346 = vadd.f32 0.0, %v2345
        %v2347 = vpop.f32.mrf.mxu0
        %2348 = vmatprep.mubr.f32.mxu0 0.0
        %2349 = vmatmul.mubr.f32.gmra.mxu0 %v2210
        %v2350 = vpop.f32.mrf.mxu0
        %v2351 = vadd.f32 0.0, %v2350
        %v2352 = vpop.f32.mrf.mxu0
        %2353 = vmatprep.mubr.f32.mxu0 0.0
        %2354 = vmatmul.mubr.f32.gmra.mxu0 %v2213
        %v2355 = vpop.f32.mrf.mxu0
        %v2356 = vadd.f32 0.0, %v2355
        %v2357 = vpop.f32.mrf.mxu0
        %2358 = vmatprep.mubr.f32.mxu0 0.0
        %2359 = vmatmul.mubr.f32.gmra.mxu0 %v2216
        %v2360 = vpop.f32.mrf.mxu0
        %v2361 = vadd.f32 0.0, %v2360
        %v2362 = vpop.f32.mrf.mxu0
        %2363 = vmatprep.mubr.f32.mxu0 0.0
        %2364 = vmatmul.mubr.f32.gmra.mxu0 %v2219
        %v2365 = vpop.f32.mrf.mxu0
        %v2366 = vadd.f32 0.0, %v2365
        %v2367 = vpop.f32.mrf.mxu0
        %2368 = vdwg.mxu0
        %v2369 = vadd.f32 %v2137, %v2291
        %v2370 = vadd.f32 %v2138, %v2296
        %v2371 = vadd.f32 %v2139, %v2301
        %v2372 = vadd.f32 %v2140, %v2306
        %v2373 = vadd.f32 %v2141, %v2311
        %v2374 = vadd.f32 %v2142, %v2316
        %v2375 = vadd.f32 %v2143, %v2321
        %v2376 = vadd.f32 %v2144, %v2326
        %v2377 = vadd.f32 %v2145, %v2331
        %v2378 = vadd.f32 %v2146, %v2336
        %v2379 = vadd.f32 %v2147, %v2341
        %v2380 = vadd.f32 %v2148, %v2346
        %v2381 = vadd.f32 %v2149, %v2351
        %v2382 = vadd.f32 %v2150, %v2356
        %v2383 = vadd.f32 %v2151, %v2361
        %v2384 = vadd.f32 %v2152, %v2366
        %s2385 = sadd.s32 %s447, 34
        %s2386 = scalar_lea.vmem %s440, %s2385
        %v2387 = vld [vmem:[%s2386] sm:$0xff]
        %v2388 = vld [vmem:[%s2386 + $0x8] sm:$0xff]
        %v2389 = vld [vmem:[%s2386 + $0x10] sm:$0xff]
        %v2390 = vld [vmem:[%s2386 + $0x18] sm:$0xff]
        %v2391 = vld [vmem:[%s2386 + $0x20] sm:$0xff]
        %v2392 = vld [vmem:[%s2386 + $0x28] sm:$0xff]
        %v2393 = vld [vmem:[%s2386 + $0x30] sm:$0xff]
        %v2394 = vld [vmem:[%s2386 + $0x38] sm:$0xff]
        %v2395 = vld [vmem:[%s2386 + $0x40] sm:$0xff]
        %v2396 = vld [vmem:[%s2386 + $0x48] sm:$0xff]
        %v2397 = vld [vmem:[%s2386 + $0x50] sm:$0xff]
        %v2398 = vld [vmem:[%s2386 + $0x58] sm:$0xff]
        %v2399 = vld [vmem:[%s2386 + $0x60] sm:$0xff]
        %v2400 = vld [vmem:[%s2386 + $0x68] sm:$0xff]
        %v2401 = vld [vmem:[%s2386 + $0x70] sm:$0xff]
        %v2402 = vld [vmem:[%s2386 + $0x78] sm:$0xff]
        %v2403 = vmul.f32 %v2387, %v465
        %v2404 = vmul.f32 %v2388, %v466
        %v2405 = vmul.f32 %v2389, %v467
        %v2406 = vmul.f32 %v2390, %v468
        %v2407 = vmul.f32 %v2391, %v469
        %v2408 = vmul.f32 %v2392, %v470
        %v2409 = vmul.f32 %v2393, %v471
        %v2410 = vmul.f32 %v2394, %v472
        %v2411 = vmul.f32 %v2395, %v473
        %v2412 = vmul.f32 %v2396, %v474
        %v2413 = vmul.f32 %v2397, %v475
        %v2414 = vmul.f32 %v2398, %v476
        %v2415 = vmul.f32 %v2399, %v477
        %v2416 = vmul.f32 %v2400, %v478
        %v2417 = vmul.f32 %v2401, %v479
        %v2418 = vmul.f32 %v2402, %v480
        %s2419 = scalar_lea.vmem %s2, 32
        %v2420 = vld [vmem:[%s2419] sm:$0xf]
        %v2422 = vsel %vm535, %v2403, 0
        %v2425 = vsel %vm535, %v2404, 0
        %v2428 = vsel %vm535, %v2405, 0
        %v2431 = vsel %vm535, %v2406, 0
        %v2434 = vsel %vm535, %v2407, 0
        %v2437 = vsel %vm535, %v2408, 0
        %v2440 = vsel %vm535, %v2409, 0
        %v2443 = vsel %vm535, %v2410, 0
        %v2446 = vsel %vm535, %v2411, 0
        %v2449 = vsel %vm535, %v2412, 0
        %v2452 = vsel %vm535, %v2413, 0
        %v2455 = vsel %vm535, %v2414, 0
        %v2458 = vsel %vm535, %v2415, 0
        %v2461 = vsel %vm535, %v2416, 0
        %v2464 = vsel %vm535, %v2417, 0
        %v2467 = vsel %vm535, %v2418, 0
        %v2470 = vsel %vm584, %v2420, 0
        %2472 = vmatprep.subr.mxu0 0.0
        %2473 = vmatpush1.msra.mxu0 0.0
        %2474 = vmatprep.subr.mxu0 0.0
        %2475 = vmatpush1.msra.mxu0 0.0
        %2476 = vmatprep.subr.mxu0 0.0
        %2477 = vmatpush1.msra.mxu0 0.0
        %2478 = vmatprep.subr.mxu0 0.0
        %2479 = vmatpush1.msra.mxu0 0.0
        %2480 = vmatprep.subr.mxu0 0.0
        %2481 = vmatpush1.msra.mxu0 0.0
        %2482 = vmatprep.subr.mxu0 0.0
        %2483 = vmatpush1.msra.mxu0 0.0
        %2484 = vmatprep.subr.mxu0 0.0
        %2485 = vmatpush1.msra.mxu0 0.0
        %2486 = vmatprep.subr.mxu0 0.0
        %2487 = vmatpush1.msra.mxu0 0.0
        %2488 = vmatprep.subr.mxu0 0.0
        %2489 = vmatpush1.msra.mxu0 0.0
        %2490 = vmatprep.subr.mxu0 0.0
        %2491 = vmatpush1.msra.mxu0 0.0
        %2492 = vmatprep.subr.mxu0 0.0
        %2493 = vmatpush1.msra.mxu0 0.0
        %2494 = vmatprep.subr.mxu0 0.0
        %2495 = vmatpush1.msra.mxu0 0.0
        %2496 = vmatprep.subr.mxu0 0.0
        %2497 = vmatpush1.msra.mxu0 0.0
        %2498 = vmatprep.subr.mxu0 0.0
        %2499 = vmatpush1.msra.mxu0 0.0
        %2500 = vmatprep.subr.mxu0 0.0
        %2501 = vmatpush1.msra.mxu0 0.0
        %2502 = vmatprep.subr.mxu0 0.0
        %2503 = vmatpush1.msra.mxu0 %v2470
        %2504 = vmatprep.subr.mxu0 0.0
        %2505 = vmatpush2.msra.mxu0 0.0
        %2506 = vmatprep.subr.mxu0 0.0
        %2507 = vmatpush2.msra.mxu0 0.0
        %2508 = vmatprep.subr.mxu0 0.0
        %2509 = vmatpush2.msra.mxu0 0.0
        %2510 = vmatprep.subr.mxu0 0.0
        %2511 = vmatpush2.msra.mxu0 0.0
        %2512 = vmatprep.subr.mxu0 0.0
        %2513 = vmatpush2.msra.mxu0 0.0
        %2514 = vmatprep.subr.mxu0 0.0
        %2515 = vmatpush2.msra.mxu0 0.0
        %2516 = vmatprep.subr.mxu0 0.0
        %2517 = vmatpush2.msra.mxu0 0.0
        %2518 = vmatprep.subr.mxu0 0.0
        %2519 = vmatpush2.msra.mxu0 0.0
        %2520 = vmatprep.subr.mxu0 0.0
        %2521 = vmatpush2.msra.mxu0 0.0
        %2522 = vmatprep.subr.mxu0 0.0
        %2523 = vmatpush2.msra.mxu0 0.0
        %2524 = vmatprep.subr.mxu0 0.0
        %2525 = vmatpush2.msra.mxu0 0.0
        %2526 = vmatprep.subr.mxu0 0.0
        %2527 = vmatpush2.msra.mxu0 0.0
        %2528 = vmatprep.subr.mxu0 0.0
        %2529 = vmatpush2.msra.mxu0 0.0
        %2530 = vmatprep.subr.mxu0 0.0
        %2531 = vmatpush2.msra.mxu0 0.0
        %2532 = vmatprep.subr.mxu0 0.0
        %2533 = vmatpush2.msra.mxu0 0.0
        %2534 = vmatprep.subr.mxu0 0.0
        %2535 = vmatpush2.msra.mxu0 0.0
        %2536 = vmatprep.mubr.f32.mxu0 0.0
        %2537 = vmatmul.mubr.f32.gmra.mxu0 %v2422
        %v2538 = vpop.f32.mrf.mxu0
        %v2539 = vadd.f32 0.0, %v2538
        %v2540 = vpop.f32.mrf.mxu0
        %2541 = vmatprep.mubr.f32.mxu0 0.0
        %2542 = vmatmul.mubr.f32.gmra.mxu0 %v2425
        %v2543 = vpop.f32.mrf.mxu0
        %v2544 = vadd.f32 0.0, %v2543
        %v2545 = vpop.f32.mrf.mxu0
        %2546 = vmatprep.mubr.f32.mxu0 0.0
        %2547 = vmatmul.mubr.f32.gmra.mxu0 %v2428
        %v2548 = vpop.f32.mrf.mxu0
        %v2549 = vadd.f32 0.0, %v2548
        %v2550 = vpop.f32.mrf.mxu0
        %2551 = vmatprep.mubr.f32.mxu0 0.0
        %2552 = vmatmul.mubr.f32.gmra.mxu0 %v2431
        %v2553 = vpop.f32.mrf.mxu0
        %v2554 = vadd.f32 0.0, %v2553
        %v2555 = vpop.f32.mrf.mxu0
        %2556 = vmatprep.mubr.f32.mxu0 0.0
        %2557 = vmatmul.mubr.f32.gmra.mxu0 %v2434
        %v2558 = vpop.f32.mrf.mxu0
        %v2559 = vadd.f32 0.0, %v2558
        %v2560 = vpop.f32.mrf.mxu0
        %2561 = vmatprep.mubr.f32.mxu0 0.0
        %2562 = vmatmul.mubr.f32.gmra.mxu0 %v2437
        %v2563 = vpop.f32.mrf.mxu0
        %v2564 = vadd.f32 0.0, %v2563
        %v2565 = vpop.f32.mrf.mxu0
        %2566 = vmatprep.mubr.f32.mxu0 0.0
        %2567 = vmatmul.mubr.f32.gmra.mxu0 %v2440
        %v2568 = vpop.f32.mrf.mxu0
        %v2569 = vadd.f32 0.0, %v2568
        %v2570 = vpop.f32.mrf.mxu0
        %2571 = vmatprep.mubr.f32.mxu0 0.0
        %2572 = vmatmul.mubr.f32.gmra.mxu0 %v2443
        %v2573 = vpop.f32.mrf.mxu0
        %v2574 = vadd.f32 0.0, %v2573
        %v2575 = vpop.f32.mrf.mxu0
        %2576 = vmatprep.mubr.f32.mxu0 0.0
        %2577 = vmatmul.mubr.f32.gmra.mxu0 %v2446
        %v2578 = vpop.f32.mrf.mxu0
        %v2579 = vadd.f32 0.0, %v2578
        %v2580 = vpop.f32.mrf.mxu0
        %2581 = vmatprep.mubr.f32.mxu0 0.0
        %2582 = vmatmul.mubr.f32.gmra.mxu0 %v2449
        %v2583 = vpop.f32.mrf.mxu0
        %v2584 = vadd.f32 0.0, %v2583
        %v2585 = vpop.f32.mrf.mxu0
        %2586 = vmatprep.mubr.f32.mxu0 0.0
        %2587 = vmatmul.mubr.f32.gmra.mxu0 %v2452
        %v2588 = vpop.f32.mrf.mxu0
        %v2589 = vadd.f32 0.0, %v2588
        %v2590 = vpop.f32.mrf.mxu0
        %2591 = vmatprep.mubr.f32.mxu0 0.0
        %2592 = vmatmul.mubr.f32.gmra.mxu0 %v2455
        %v2593 = vpop.f32.mrf.mxu0
        %v2594 = vadd.f32 0.0, %v2593
        %v2595 = vpop.f32.mrf.mxu0
        %2596 = vmatprep.mubr.f32.mxu0 0.0
        %2597 = vmatmul.mubr.f32.gmra.mxu0 %v2458
        %v2598 = vpop.f32.mrf.mxu0
        %v2599 = vadd.f32 0.0, %v2598
        %v2600 = vpop.f32.mrf.mxu0
        %2601 = vmatprep.mubr.f32.mxu0 0.0
        %2602 = vmatmul.mubr.f32.gmra.mxu0 %v2461
        %v2603 = vpop.f32.mrf.mxu0
        %v2604 = vadd.f32 0.0, %v2603
        %v2605 = vpop.f32.mrf.mxu0
        %2606 = vmatprep.mubr.f32.mxu0 0.0
        %2607 = vmatmul.mubr.f32.gmra.mxu0 %v2464
        %v2608 = vpop.f32.mrf.mxu0
        %v2609 = vadd.f32 0.0, %v2608
        %v2610 = vpop.f32.mrf.mxu0
        %2611 = vmatprep.mubr.f32.mxu0 0.0
        %2612 = vmatmul.mubr.f32.gmra.mxu0 %v2467
        %v2613 = vpop.f32.mrf.mxu0
        %v2614 = vadd.f32 0.0, %v2613
        %v2615 = vpop.f32.mrf.mxu0
        %2616 = vdwg.mxu0
        %v2617 = vadd.f32 %v2369, %v2539
        %v2618 = vadd.f32 %v2370, %v2544
        %v2619 = vadd.f32 %v2371, %v2549
        %v2620 = vadd.f32 %v2372, %v2554
        %v2621 = vadd.f32 %v2373, %v2559
        %v2622 = vadd.f32 %v2374, %v2564
        %v2623 = vadd.f32 %v2375, %v2569
        %v2624 = vadd.f32 %v2376, %v2574
        %v2625 = vadd.f32 %v2377, %v2579
        %v2626 = vadd.f32 %v2378, %v2584
        %v2627 = vadd.f32 %v2379, %v2589
        %v2628 = vadd.f32 %v2380, %v2594
        %v2629 = vadd.f32 %v2381, %v2599
        %v2630 = vadd.f32 %v2382, %v2604
        %v2631 = vadd.f32 %v2383, %v2609
        %v2632 = vadd.f32 %v2384, %v2614
        %v2633 = vld [vmem:[%s3] sm:$0x1]
        %v2635 = vlaneseq
        %v2636 = vshrl.u32 %v2635, 7
        %v2637 = vsub.s32 0, %v2636
        %v2638 = vrot.slane %v2633, %v2637
        %v2640 = vadd.f32 %v2617, %v2638
        %v2641 = vadd.f32 %v2618, %v2638
        %v2642 = vadd.f32 %v2619, %v2638
        %v2643 = vadd.f32 %v2620, %v2638
        %v2644 = vadd.f32 %v2621, %v2638
        %v2645 = vadd.f32 %v2622, %v2638
        %v2646 = vadd.f32 %v2623, %v2638
        %v2647 = vadd.f32 %v2624, %v2638
        %v2648 = vadd.f32 %v2625, %v2638
        %v2649 = vadd.f32 %v2626, %v2638
        %v2650 = vadd.f32 %v2627, %v2638
        %v2651 = vadd.f32 %v2628, %v2638
        %v2652 = vadd.f32 %v2629, %v2638
        %v2653 = vadd.f32 %v2630, %v2638
        %v2654 = vadd.f32 %v2631, %v2638
        %v2655 = vadd.f32 %v2632, %v2638
        %v2656 = vmax.f32 %v2640, 0.0
        %v2657 = vmax.f32 %v2641, 0.0
        %v2658 = vmax.f32 %v2642, 0.0
        %v2659 = vmax.f32 %v2643, 0.0
        %v2660 = vmax.f32 %v2644, 0.0
        %v2661 = vmax.f32 %v2645, 0.0
        %v2662 = vmax.f32 %v2646, 0.0
        %v2663 = vmax.f32 %v2647, 0.0
        %v2664 = vmax.f32 %v2648, 0.0
        %v2665 = vmax.f32 %v2649, 0.0
        %v2666 = vmax.f32 %v2650, 0.0
        %v2667 = vmax.f32 %v2651, 0.0
        %v2668 = vmax.f32 %v2652, 0.0
        %v2669 = vmax.f32 %v2653, 0.0
        %v2670 = vmax.f32 %v2654, 0.0
        %v2671 = vmax.f32 %v2655, 0.0
        %v2672 = vld [vmem:[#allocation2] sm:$0x1]
        %2673 = vmatprep.subr.mxu0 0.0
        %2674 = vmatpush1.msra.mxu0 %v2671
        %2675 = vmatprep.subr.mxu0 0.0
        %2676 = vmatpush1.msra.mxu0 %v2670
        %2677 = vmatprep.subr.mxu0 0.0
        %2678 = vmatpush1.msra.mxu0 %v2669
        %2679 = vmatprep.subr.mxu0 0.0
        %2680 = vmatpush1.msra.mxu0 %v2668
        %2681 = vmatprep.subr.mxu0 0.0
        %2682 = vmatpush1.msra.mxu0 %v2667
        %2683 = vmatprep.subr.mxu0 0.0
        %2684 = vmatpush1.msra.mxu0 %v2666
        %2685 = vmatprep.subr.mxu0 0.0
        %2686 = vmatpush1.msra.mxu0 %v2665
        %2687 = vmatprep.subr.mxu0 0.0
        %2688 = vmatpush1.msra.mxu0 %v2664
        %2689 = vmatprep.subr.mxu0 0.0
        %2690 = vmatpush1.msra.mxu0 %v2663
        %2691 = vmatprep.subr.mxu0 0.0
        %2692 = vmatpush1.msra.mxu0 %v2662
        %2693 = vmatprep.subr.mxu0 0.0
        %2694 = vmatpush1.msra.mxu0 %v2661
        %2695 = vmatprep.subr.mxu0 0.0
        %2696 = vmatpush1.msra.mxu0 %v2660
        %2697 = vmatprep.subr.mxu0 0.0
        %2698 = vmatpush1.msra.mxu0 %v2659
        %2699 = vmatprep.subr.mxu0 0.0
        %2700 = vmatpush1.msra.mxu0 %v2658
        %2701 = vmatprep.subr.mxu0 0.0
        %2702 = vmatpush1.msra.mxu0 %v2657
        %2703 = vmatprep.subr.mxu0 0.0
        %2704 = vmatpush1.msra.mxu0 %v2656
        %2705 = vmatprep.subr.mxu0 0.0
        %2706 = vmatpush2.msra.mxu0 0.0
        %2707 = vmatprep.subr.mxu0 0.0
        %2708 = vmatpush2.msra.mxu0 0.0
        %2709 = vmatprep.subr.mxu0 0.0
        %2710 = vmatpush2.msra.mxu0 0.0
        %2711 = vmatprep.subr.mxu0 0.0
        %2712 = vmatpush2.msra.mxu0 0.0
        %2713 = vmatprep.subr.mxu0 0.0
        %2714 = vmatpush2.msra.mxu0 0.0
        %2715 = vmatprep.subr.mxu0 0.0
        %2716 = vmatpush2.msra.mxu0 0.0
        %2717 = vmatprep.subr.mxu0 0.0
        %2718 = vmatpush2.msra.mxu0 0.0
        %2719 = vmatprep.subr.mxu0 0.0
        %2720 = vmatpush2.msra.mxu0 0.0
        %2721 = vmatprep.subr.mxu0 0.0
        %2722 = vmatpush2.msra.mxu0 0.0
        %2723 = vmatprep.subr.mxu0 0.0
        %2724 = vmatpush2.msra.mxu0 0.0
        %2725 = vmatprep.subr.mxu0 0.0
        %2726 = vmatpush2.msra.mxu0 0.0
        %2727 = vmatprep.subr.mxu0 0.0
        %2728 = vmatpush2.msra.mxu0 0.0
        %2729 = vmatprep.subr.mxu0 0.0
        %2730 = vmatpush2.msra.mxu0 0.0
        %2731 = vmatprep.subr.mxu0 0.0
        %2732 = vmatpush2.msra.mxu0 0.0
        %2733 = vmatprep.subr.mxu0 0.0
        %2734 = vmatpush2.msra.mxu0 0.0
        %2735 = vmatprep.subr.mxu0 0.0
        %2736 = vmatpush2.msra.mxu0 0.0
        %2737 = vmatprep.mubr.f32.mxu0 0.0
        %2738 = vmatmul.mubr.f32.gmra.mxu0 1.0
        %v2739 = vpop.f32.mrf.mxu0
        %v2740 = vadd.f32 0.0, %v2739
        %v2741 = vpop.f32.mrf.mxu0
        %2742 = vdwg.mxu0
        %v2743 = vadd.f32 %v2672, %v2740
        %2744 = vst [vmem:[#allocation2] sm:$0x1] %v2743
        %p2745 = scmp.eq.s32.totalorder %s25, 1
        // Predicated region
        $region87: #{tpu_custom_call.1} parent=77 // pred_check
          %p2746 = pneg %p2745
        $region88: #{tpu_custom_call.1} parent=77 // pred_check_branch
          %2748 = sbr.rel (%p2746) target = $region90
        $region89: #{tpu_custom_call.1} parent=77 // pred_region
          %v2749 = vld [vmem:[#allocation2] sm:$0x1]
          %v2750 = vmul.f32 %v2749, 0.00390625
          %v2751 = vld [vmem:[%s4] sm:$0xff]
          %v2752 = vld [vmem:[%s4 + $0x8] sm:$0xff]
          %v2753 = vld [vmem:[%s4 + $0x10] sm:$0xff]
          %v2754 = vld [vmem:[%s4 + $0x18] sm:$0xff]
          %v2755 = vld [vmem:[%s4 + $0x20] sm:$0xff]
          %v2756 = vld [vmem:[%s4 + $0x28] sm:$0xff]
          %v2757 = vld [vmem:[%s4 + $0x30] sm:$0xff]
          %v2758 = vld [vmem:[%s4 + $0x38] sm:$0xff]
          %v2759 = vld [vmem:[%s4 + $0x40] sm:$0xff]
          %v2760 = vld [vmem:[%s4 + $0x48] sm:$0xff]
          %v2761 = vld [vmem:[%s4 + $0x50] sm:$0xff]
          %v2762 = vld [vmem:[%s4 + $0x58] sm:$0xff]
          %v2763 = vld [vmem:[%s4 + $0x60] sm:$0xff]
          %v2764 = vld [vmem:[%s4 + $0x68] sm:$0xff]
          %v2765 = vld [vmem:[%s4 + $0x70] sm:$0xff]
          %v2766 = vld [vmem:[%s4 + $0x78] sm:$0xff]
          %v2767 = vld [vmem:[%s5] sm:$0x1]
          %2768 = vmatprep.subr.mxu0 0.0
          %2769 = vmatpush1.msra.mxu0 %v2766
          %2770 = vmatprep.subr.mxu0 0.0
          %2771 = vmatpush1.msra.mxu0 %v2765
          %2772 = vmatprep.subr.mxu0 0.0
          %2773 = vmatpush1.msra.mxu0 %v2764
          %2774 = vmatprep.subr.mxu0 0.0
          %2775 = vmatpush1.msra.mxu0 %v2763
          %2776 = vmatprep.subr.mxu0 0.0
          %2777 = vmatpush1.msra.mxu0 %v2762
          %2778 = vmatprep.subr.mxu0 0.0
          %2779 = vmatpush1.msra.mxu0 %v2761
          %2780 = vmatprep.subr.mxu0 0.0
          %2781 = vmatpush1.msra.mxu0 %v2760
          %2782 = vmatprep.subr.mxu0 0.0
          %2783 = vmatpush1.msra.mxu0 %v2759
          %2784 = vmatprep.subr.mxu0 0.0
          %2785 = vmatpush1.msra.mxu0 %v2758
          %2786 = vmatprep.subr.mxu0 0.0
          %2787 = vmatpush1.msra.mxu0 %v2757
          %2788 = vmatprep.subr.mxu0 0.0
          %2789 = vmatpush1.msra.mxu0 %v2756
          %2790 = vmatprep.subr.mxu0 0.0
          %2791 = vmatpush1.msra.mxu0 %v2755
          %2792 = vmatprep.subr.mxu0 0.0
          %2793 = vmatpush1.msra.mxu0 %v2754
          %2794 = vmatprep.subr.mxu0 0.0
          %2795 = vmatpush1.msra.mxu0 %v2753
          %2796 = vmatprep.subr.mxu0 0.0
          %2797 = vmatpush1.msra.mxu0 %v2752
          %2798 = vmatprep.subr.mxu0 0.0
          %2799 = vmatpush1.msra.mxu0 %v2751
          %2800 = vmatprep.subr.mxu0 0.0
          %2801 = vmatpush2.msra.mxu0 0.0
          %2802 = vmatprep.subr.mxu0 0.0
          %2803 = vmatpush2.msra.mxu0 0.0
          %2804 = vmatprep.subr.mxu0 0.0
          %2805 = vmatpush2.msra.mxu0 0.0
          %2806 = vmatprep.subr.mxu0 0.0
          %2807 = vmatpush2.msra.mxu0 0.0
          %2808 = vmatprep.subr.mxu0 0.0
          %2809 = vmatpush2.msra.mxu0 0.0
          %2810 = vmatprep.subr.mxu0 0.0
          %2811 = vmatpush2.msra.mxu0 0.0
          %2812 = vmatprep.subr.mxu0 0.0
          %2813 = vmatpush2.msra.mxu0 0.0
          %2814 = vmatprep.subr.mxu0 0.0
          %2815 = vmatpush2.msra.mxu0 0.0
          %2816 = vmatprep.subr.mxu0 0.0
          %2817 = vmatpush2.msra.mxu0 0.0
          %2818 = vmatprep.subr.mxu0 0.0
          %2819 = vmatpush2.msra.mxu0 0.0
          %2820 = vmatprep.subr.mxu0 0.0
          %2821 = vmatpush2.msra.mxu0 0.0
          %2822 = vmatprep.subr.mxu0 0.0
          %2823 = vmatpush2.msra.mxu0 0.0
          %2824 = vmatprep.subr.mxu0 0.0
          %2825 = vmatpush2.msra.mxu0 0.0
          %2826 = vmatprep.subr.mxu0 0.0
          %2827 = vmatpush2.msra.mxu0 0.0
          %2828 = vmatprep.subr.mxu0 0.0
          %2829 = vmatpush2.msra.mxu0 0.0
          %2830 = vmatprep.subr.mxu0 0.0
          %2831 = vmatpush2.msra.mxu0 0.0
          %2832 = vmatprep.mubr.f32.mxu0 0.0
          %2833 = vmatmul.mubr.f32.gmra.mxu0 %v2750
          %v2834 = vpop.f32.mrf.mxu0
          %v2835 = vadd.f32 %v2767, %v2834
          %v2836 = vpop.f32.mrf.mxu0
          %2837 = vdwg.mxu0
          %2838 = vst [vmem:[%s435] sm:$0x1] %v2835
        $region90: #{tpu_custom_call.1} parent=77 // pred_fallthru
          _
        %s2839 = sand.u32 %s176, 1
        %s2840 = scalar_lea.sflag [#allocation5], %s2839
        %s2841 = sand.u32 %s176, 1
        %s2842 = scalar_lea.vmem [#allocation4], %s2841
        // Predicated region
        $region91: #{tpu_custom_call.1} parent=77 // pred_check
          %p2843 = pneg %p186
        $region92: #{tpu_custom_call.1} parent=77 // pred_check_branch
          %2845 = sbr.rel (%p2843) target = $region94
        $region93: #{tpu_custom_call.1} parent=77 // pred_region
          %s2847 = ssub.s32 16, 16
          %2848 = vsyncadd %s2840, %s2847
          %s2849 = smul.addr %s24, 16
          %s2850 = scalar_lea.hbm %s6, %s2849
          %s2852 = sshll.u32 %s2842, 4
          %s2853 = int_to_ptr.vmem [resolvable:$true] %s2852
          %2855 = dma.vmem_to_hbm [thread:$0]  %s2853, 16, %s2850, %s2840
        $region94: #{tpu_custom_call.1} parent=77 // pred_fallthru
          _
      $region78: #{tpu_custom_call.1} parent=5 // pred_fallthru
        _
      %p2856 = scmp.le.s32.totalorder 2, %s15
      // Predicated region
      $region95: #{tpu_custom_call.1} parent=5 // pred_check
        %p2857 = pneg %p2856
      $region96: #{tpu_custom_call.1} parent=5 // pred_check_branch
        %2859 = sbr.rel (%p2857) target = $region98
      $region97: #{tpu_custom_call.1} parent=5 // pred_region
        %s2860 = ssub.s32 %s15, 2
        // Predicated region
        $region99: #{tpu_custom_call.1} parent=97 // pred_check
          %p2861 = pneg %p192
        $region100: #{tpu_custom_call.1} parent=97 // pred_check_branch
          %2863 = sbr.rel (%p2861) target = $region102
        $region101: #{tpu_custom_call.1} parent=97 // pred_region
          %s2864 = sand.u32 %s177, 1
          %s2865 = scalar_lea.sflag [#allocation5], %s2864
          %s2866 = sand.u32 %s177, 1
          %s2867 = scalar_lea.vmem [#allocation4], %s2866
          %2868 = dma.done %s2865, 16
        $region102: #{tpu_custom_call.1} parent=97 // pred_fallthru
          _
      $region98: #{tpu_custom_call.1} parent=5 // pred_fallthru
        _
    $region6: #{tpu_custom_call.1} parent=1 // loop_footer
      %s19 = sadd.s32 1, %s15
    $region7: #{tpu_custom_call.1} parent=1 // loop_footer_branch
      %14 = sbr.rel target = $region3
    $region8: #{tpu_custom_call.1} parent=1 // loop_exit
      _
    %2869 = vsyncpa [#allocation5], 1
    %s2870 = scalar_lea.sflag [#allocation5], 1
    %2871 = vsyncpa %s2870, 1

</llo_original>
